<compile_context>
chip_gen: v6e
topology: v6e:2x2x1
jax: 0.10.0
libtpu: 0.0.40
codegen_flags: <defaults>
</compile_context>

<pallas_src>
import functools

import jax
import jax.numpy as jnp
import numpy as np
from jax import lax
from jax.experimental import pallas as pl
from jax.experimental.pallas import tpu as pltpu

EPS = 1e-5  # torch InstanceNorm1d default eps (affine=False, no running stats)


def _inorm_lane_segments(t, pool_ref, nb):
    """InstanceNorm over lane segments of width HW (two-pass variance).

    t: (R, N) f32 with N = nb*HW lanes.  nb == 1 -> plain lane reduction;
    nb > 1 -> segmented mean via one lane-dense MXU matmul against the
    block-diagonal averaging matrix held in pool_ref (N, N)."""
    if nb == 1:
        mu = jnp.mean(t, axis=-1, keepdims=True)
        d = t - mu
        var = jnp.mean(d * d, axis=-1, keepdims=True)
    else:
        pool = pool_ref[...]
        mu = jnp.dot(t, pool, preferred_element_type=jnp.float32)
        d = t - mu
        var = jnp.dot(d * d, pool, preferred_element_type=jnp.float32)
    return d * lax.rsqrt(var + EPS)


def tgmm_kernel(nb, hw, nl, num_heads, dim, kc, vc,
                x_ref, l_ref, lT_ref, mrow_ref, mcol_ref,
                w_xq_ref, b_xq_ref, w_v_ref, b_v_ref,
                w_kv2T_ref, b_kv2T_ref, w1_ref, b1_ref,
                wmm_ref, bmm_ref, pool_ref,
                mm_ref, lnewT_ref, out_acc):
    """One grid step processes `nb` batch elements packed along the lane dim."""
    dk = kc // num_heads
    dv = vc // num_heads          # num_heads * dv == vc (asserted in wrapper)
    n_tot = nb * hw
    m_tot = nb * nl
    scale = kc ** (-0.5)

    x = x_ref[0]                  # (C,  N) bf16, channel-major
    lch = l_ref[0]                # (Cl, M) bf16, channel-major
    ltk = lT_ref[0]               # (M, Cl) bf16, token-major
    mrow = mrow_ref[0]            # (1, M)  f32
    mcol = mcol_ref[0]            # (M, 1)  f32

    # ---- fused vis_project + f_query conv: one lane-dense bf16 MXU matmul ----
    xproj = (jnp.dot(w_xq_ref[...], x, preferred_element_type=jnp.float32)
             + b_xq_ref[...])                                     # (C+Kc, N)
    vis = jnp.maximum(xproj[:dim, :], 0.0)                        # (C, N)  ReLU
    qn = _inorm_lane_segments(xproj[dim:, :], pool_ref, nb)       # (Kc, N)

    # ---- f_value (channel-major: feeds out_h = value_h @ p_T) ----
    value = (jnp.dot(w_v_ref[...], lch, preferred_element_type=jnp.float32)
             + b_v_ref[...]) * mrow                               # (Vc, M)

    # ---- fused f_key + f_value2 in token-major layout (no transposes needed) ----
    lprojT = (jnp.dot(ltk, w_kv2T_ref[...], preferred_element_type=jnp.float32)
              + b_kv2T_ref[...]) * mcol                           # (M, Kc+Vc)
    keyT = lprojT[:, :kc]                                         # (M, Kc)
    value2T = lprojT[:, kc:]                                      # (M, Vc)

    # Token-mask bias; for nb > 1 add a block-diagonal -3e4 bias so cross-batch
    # attention probabilities underflow to exactly 0 in f32 (keeps packed
    # batches independent in the whole-slab softmax, pooling and out matmuls).
    bias = 10000.0 * mcol - 10000.0                               # (M, 1)
    if nb > 1:
        rowb = lax.broadcasted_iota(jnp.int32, (m_tot, n_tot), 0) // nl
        colb = lax.broadcasted_iota(jnp.int32, (m_tot, n_tot), 1) // hw
        bias = bias + jnp.where(rowb == colb, 0.0, -30000.0)      # (M, N)

    # ---- per-head attention over the whole packed slab (no per-batch loop) ----
    for h in range(num_heads):
        kh = keyT[:, h * dk:(h + 1) * dk]                         # (M, dk)
        qh = qn[h * dk:(h + 1) * dk, :]                           # (dk, N)
        sim = jnp.dot(kh, qh, preferred_element_type=jnp.float32)  # (M, N)
        sim = sim * scale + bias
        sim = sim - jnp.max(sim, axis=0, keepdims=True)
        p = jnp.exp(sim)                                          # (M, N)
        p = p * pl.reciprocal(jnp.sum(p, axis=0, keepdims=True), approx=True)

        # AdaptiveAvgPool2d([1, NL]) over HW; cross-batch entries of p are 0,
        # so a full lane-sum / HW equals the per-batch mean.
        pool_h = jnp.sum(p, axis=1, keepdims=True) * (1.0 / hw)   # (M, 1)
        lnewT_ref[0, :, h * dv:(h + 1) * dv] = (
            pool_h * value2T[:, h * dv:(h + 1) * dv])             # (M, dv)

        # out_h = value_h @ p -> (dv, N), lane-dense, into the VMEM accumulator.
        out_acc[h * dv:(h + 1) * dv, :] = jnp.dot(
            value[h * dv:(h + 1) * dv, :], p,
            preferred_element_type=jnp.float32)

    # ---- W1 conv once over the full packed slab + segmented InstanceNorm ----
    lang = _inorm_lane_segments(
        jnp.dot(w1_ref[...], out_acc[...].astype(jnp.bfloat16),
                preferred_element_type=jnp.float32) + b1_ref[...],
        pool_ref, nb)                                             # (dim, N)

    # ---- project_mm : Conv1d + ReLU over the lane-dense slab, bf16 writeback ----
    mm_in = (vis * lang).astype(jnp.bfloat16)                     # (C, N)
    mm_ref[0] = jnp.maximum(
        jnp.dot(wmm_ref[...], mm_in, preferred_element_type=jnp.float32)
        + bmm_ref[...], 0.0).astype(mm_ref.dtype)


def _pick_batch_pack(batch, hw, max_lanes=1024, min_grid=2):
    """Largest divisor of `batch` whose packed lane width stays modest while
    keeping >= min_grid grid steps when possible (both v7x TensorCores busy)."""
    divisors = [d for d in range(1, batch + 1) if batch % d == 0]
    fits = [d for d in divisors if d * hw <= max(hw, max_lanes)]
    preferred = [d for d in fits if batch // d >= min_grid]
    pool = preferred or fits or [1]
    return max(pool)


def tgmm_forward(x, l, l_mask, emb, params, num_heads, nb=None):
    B, C, H, W = x.shape
    HW = H * W
    Cl, NL = l.shape[1], l.shape[2]
    Kc = params["w_q"].shape[0]
    Vc = params["w_v"].shape[0]
    assert Kc % num_heads == 0 and Vc % num_heads == 0
    assert params["w_vis"].shape == (C, C) and params["w_q"].shape[1] == C

    if nb is None:
        nb = _pick_batch_pack(B, HW)
    assert B % nb == 0
    G = B // nb
    N = nb * HW
    M = nb * NL

    # ---- pack nb batches into the lane dim (wrapper-side layout plumbing) ----
    x_p = (x.reshape(G, nb, C, HW).transpose(0, 2, 1, 3)
             .reshape(G, C, N).astype(jnp.bfloat16))
    l_p = (l.reshape(G, nb, Cl, NL).transpose(0, 2, 1, 3)
             .reshape(G, Cl, M).astype(jnp.bfloat16))
    lT_p = (jnp.transpose(l, (0, 2, 1)).reshape(G, M, Cl).astype(jnp.bfloat16))
    mflat = l_mask.reshape(G, M).astype(jnp.float32)              # m = b_local*NL + t
    mrow_p = mflat.reshape(G, 1, M)
    mcol_p = mflat.reshape(G, M, 1)

    # Block-diagonal averaging matrix for segmented instance norms (nb > 1).
    seg = jnp.arange(N) // HW
    pool_mat = (seg[:, None] == seg[None, :]).astype(jnp.float32) / float(HW)

    # ---- fused / pre-cast weights (bf16 MXU operands, f32 biases) ----
    w_xq = jnp.concatenate([params["w_vis"], params["w_q"]], 0).astype(jnp.bfloat16)
    b_xq = jnp.concatenate([params["b_vis"], params["b_q"]], 0).astype(jnp.float32)
    w_v = params["w_v"].astype(jnp.bfloat16)
    b_v = params["b_v"].astype(jnp.float32)
    w_kv2T = jnp.concatenate([params["w_k"], params["w_v2"]], 0).T.astype(jnp.bfloat16)
    b_kv2T = jnp.concatenate([params["b_k"], params["b_v2"]], 0).reshape(1, Kc + Vc).astype(jnp.float32)
    w1 = params["w_W1"].astype(jnp.bfloat16)
    b1 = params["b_W1"].astype(jnp.float32)
    wmm = params["w_mm"].astype(jnp.bfloat16)
    bmm = params["b_mm"].astype(jnp.float32)
    plist = [w_xq, b_xq, w_v, b_v, w_kv2T, b_kv2T, w1, b1, wmm, bmm, pool_mat]

    data_specs = [
        pl.BlockSpec((1, C, N), lambda g: (g, 0, 0)),
        pl.BlockSpec((1, Cl, M), lambda g: (g, 0, 0)),
        pl.BlockSpec((1, M, Cl), lambda g: (g, 0, 0)),
        pl.BlockSpec((1, 1, M), lambda g: (g, 0, 0)),
        pl.BlockSpec((1, M, 1), lambda g: (g, 0, 0)),
    ]
    # Params are small & constant across the grid (full-array blocks, index 0).
    param_specs = [pl.BlockSpec(p.shape, lambda g: (0, 0)) for p in plist]

    out_shapes = (
        jax.ShapeDtypeStruct((G, C, N), jnp.bfloat16),   # mm, packed lane-dense
        jax.ShapeDtypeStruct((G, M, Vc), jnp.float32),   # l_new, token-major packed
    )
    out_specs = (
        pl.BlockSpec((1, C, N), lambda g: (g, 0, 0)),
        pl.BlockSpec((1, M, Vc), lambda g: (g, 0, 0)),
    )

    kernel = functools.partial(tgmm_kernel, nb, HW, NL, num_heads, C, Kc, Vc)
    mm_p, lnewT_p = pl.pallas_call(
        kernel,
        out_shape=out_shapes,
        grid_spec=pltpu.PrefetchScalarGridSpec(
            num_scalar_prefetch=0,
            grid=(G,),
            in_specs=data_specs + param_specs,
            out_specs=out_specs,
            scratch_shapes=[pltpu.VMEM((Vc, N), jnp.float32)],
        ),
        compiler_params=pltpu.CompilerParams(
            dimension_semantics=("parallel",),
            # Nothing binds at these shapes; 32 MiB stays safe on v7x's 64 MiB VMEM.
            vmem_limit_bytes=32 * 1024 * 1024),
    )(x_p, l_p, lT_p, mrow_p, mcol_p, *plist)

    # Unpack the lane-packed slabs back to module layouts.
    mm = (mm_p.astype(jnp.float32).reshape(G, C, nb, HW)
              .transpose(0, 2, 1, 3).reshape(B, C, H, W))
    l_new = (lnewT_p.reshape(G, nb, NL, Vc).transpose(0, 1, 3, 2)
                 .reshape(B, Vc, NL))

    # ---- tiny language-side heads (lane width 1 / NL): cheaper in plain JAX ----
    word_new = jnp.einsum("oc,bcn->bon", params["w_W2"], l_new) + params["b_W2"][None]
    emb_p = (jnp.einsum("oc,bcn->bon", params["w_pe"],
                        emb[..., None].astype(jnp.float32)) + params["b_pe"][None])
    l_vec = jnp.mean(l_new, axis=2, keepdims=True) * params["gamma"][0, 0] + emb_p
    l_out = jnp.einsum("oc,bcn->bon", params["w_W3"], l_vec) + params["b_W3"][None] + emb_p

    return mm, l_out, word_new


# ---------------- pure-JAX f32 reference (mirrors the PyTorch forward) ----------------
def _inorm_batched(t):
    mu = jnp.mean(t, axis=-1, keepdims=True)
    var = jnp.mean((t - mu) ** 2, axis=-1, keepdims=True)
    return (t - mu) * lax.rsqrt(var + EPS)


def tgmm_reference(x, l, l_mask, emb, P, num_heads):
    B, C, H, W = x.shape
    HW = H * W
    NL = l.shape[2]
    Kc = P["w_q"].shape[0]
    Vc = P["w_v"].shape[0]
    dk, dv = Kc // num_heads, Vc // num_heads

    def conv(w, b, t):
        return jnp.einsum("oc,bcn->bon", w, t) + b[None]

    xf = x.reshape(B, C, HW)
    mask = jnp.transpose(l_mask, (0, 2, 1))                          # (B,1,NL)

    vis = jax.nn.relu(conv(P["w_vis"], P["b_vis"], xf))
    q = _inorm_batched(conv(P["w_q"], P["b_q"], xf))
    key = conv(P["w_k"], P["b_k"], l) * mask
    val = conv(P["w_v"], P["b_v"], l) * mask
    val2 = conv(P["w_v2"], P["b_v2"], l) * mask

    qh = jnp.transpose(q.reshape(B, num_heads, dk, HW), (0, 1, 3, 2))
    kh = key.reshape(B, num_heads, dk, NL)
    vh = val.reshape(B, num_heads, dv, NL)
    v2h = val2.reshape(B, num_heads, dv, NL)

    sim = jnp.einsum("bhqd,bhdn->bhqn", qh, kh) * (Kc ** -0.5)
    sim = sim + (10000.0 * mask[:, :, None, :] - 10000.0)
    p = jax.nn.softmax(sim, axis=-1)

    pool = jnp.mean(p, axis=2, keepdims=True)                        # (B,h,1,NL)
    l_new = (pool * v2h).reshape(B, Vc, NL)
    word_new = conv(P["w_W2"], P["b_W2"], l_new)

    out = jnp.einsum("bhqn,bhdn->bhqd", p, vh)
    out = jnp.transpose(out, (0, 2, 1, 3)).reshape(B, HW, Vc)
    out = jnp.transpose(out, (0, 2, 1))
    lang = _inorm_batched(conv(P["w_W1"], P["b_W1"], out))

    emb_p = conv(P["w_pe"], P["b_pe"], emb[..., None])
    l_vec = jnp.mean(l_new, axis=2, keepdims=True) * P["gamma"][0, 0] + emb_p
    l_out = conv(P["w_W3"], P["b_W3"], l_vec) + emb_p

    mm = jax.nn.relu(conv(P["w_mm"], P["b_mm"], vis * lang))
    return mm.reshape(B, C, H, W), l_out, word_new


def make_params(key, dim, v_in, l_in, kc, vc):
    ks = jax.random.split(key, 20)
    w = lambda k, o, i: (jax.random.normal(k, (o, i), jnp.float32) * 0.05)
    b = lambda k, o: (jax.random.normal(k, (o, 1), jnp.float32) * 0.05)
    return {
        "w_vis": w(ks[0], dim, dim), "b_vis": b(ks[1], dim),
        "w_q": w(ks[2], kc, v_in), "b_q": b(ks[3], kc),
        "w_k": w(ks[4], kc, l_in), "b_k": b(ks[5], kc),
        "w_v": w(ks[6], vc, l_in), "b_v": b(ks[7], vc),
        "w_v2": w(ks[8], vc, l_in), "b_v2": b(ks[9], vc),
        "w_W1": w(ks[10], dim, vc), "b_W1": b(ks[11], dim),
        "w_W2": w(ks[12], vc, vc), "b_W2": b(ks[13], vc),
        "w_W3": w(ks[14], vc, vc), "b_W3": b(ks[15], vc),
        "w_pe": w(ks[16], vc, l_in), "b_pe": b(ks[17], vc),
        "gamma": jnp.zeros((1, 1), jnp.float32),   # module fills gamma with 0.0
        "w_mm": w(ks[18], dim, dim), "b_mm": b(ks[19], dim),
    }


if __name__ == "__main__":
    # Small shapes consistent with the module: dim == C == v_in_channels.
    B, C, H, W = 2, 32, 8, 8
    dim = v_in_channels = C
    l_in_channels = 24
    key_channels = 32
    value_channels = 32
    num_heads = 2
    NL = 8

    root = jax.random.PRNGKey(0)
    k_x, k_l, k_e, k_m, k_p = jax.random.split(root, 5)

    x = jax.random.normal(k_x, (B, C, H, W), jnp.float32)
    l = jax.random.normal(k_l, (B, l_in_channels, NL), jnp.float32)
    emb = jax.random.normal(k_e, (B, l_in_channels), jnp.float32)
    # binary mask, (B, NL, 1), keep first token always valid
    l_mask = (jax.random.uniform(k_m, (B, NL, 1)) > 0.3).astype(jnp.float32)
    l_mask = l_mask.at[:, 0, :].set(1.0)

    params = make_params(k_p, dim, v_in_channels, l_in_channels,
                         key_channels, value_channels)

    mm, l_out, word_new = tgmm_forward(x, l, l_mask, emb, params, num_heads)
    jax.block_until_ready((mm, l_out, word_new))

    mm_r, l_out_r, word_r = tgmm_reference(x, l, l_mask, emb, params, num_heads)
    # bf16 MXU operands, bf16 mm writeback and approx reciprocal -> compare
    # against the f32 reference with a tolerance that still catches any
    # structural / indexing error.
    np.testing.assert_allclose(np.asarray(mm), np.asarray(mm_r), rtol=3e-2, atol=3e-2)
    np.testing.assert_allclose(np.asarray(l_out), np.asarray(l_out_r), rtol=3e-2, atol=3e-2)
    np.testing.assert_allclose(np.asarray(word_new), np.asarray(word_r), rtol=3e-2, atol=3e-2)

    assert mm.shape == (B, C, H, W)
    assert l_out.shape == (B, value_channels, 1)
    assert word_new.shape == (B, value_channels, NL)

    print("KERNEL_OK")
</pallas_src>

<mosaic_0001>
module attributes {stable_mosaic.version = 11 : i64} {
  func.func @tgmm_kernel(%arg0: i32, %arg1: memref<1x32x64xbf16, #tpu.memory_space<vmem>>, %arg2: memref<1x24x8xbf16, #tpu.memory_space<vmem>>, %arg3: memref<1x8x24xbf16, #tpu.memory_space<vmem>>, %arg4: memref<1x1x8xf32, #tpu.memory_space<vmem>>, %arg5: memref<1x8x1xf32, #tpu.memory_space<vmem>>, %arg6: memref<64x32xbf16, #tpu.memory_space<vmem>>, %arg7: memref<64x1xf32, #tpu.memory_space<vmem>>, %arg8: memref<32x24xbf16, #tpu.memory_space<vmem>>, %arg9: memref<32x1xf32, #tpu.memory_space<vmem>>, %arg10: memref<24x64xbf16, #tpu.memory_space<vmem>>, %arg11: memref<1x64xf32, #tpu.memory_space<vmem>>, %arg12: memref<32x32xbf16, #tpu.memory_space<vmem>>, %arg13: memref<32x1xf32, #tpu.memory_space<vmem>>, %arg14: memref<32x32xbf16, #tpu.memory_space<vmem>>, %arg15: memref<32x1xf32, #tpu.memory_space<vmem>>, %arg16: memref<64x64xf32, #tpu.memory_space<vmem>>, %arg17: memref<1x32x64xbf16, #tpu.memory_space<vmem>>, %arg18: memref<1x8x32xf32, #tpu.memory_space<vmem>>, %arg19: memref<32x64xf32, #tpu.memory_space<vmem>>) attributes {dimension_semantics = [#tpu.dimension_semantics<parallel>], iteration_bounds = array<i64: 2>, scalar_prefetch = 0 : i64, scratch_operands = 1 : i64, tpu.core_type = #tpu.core_type<tc>, window_params = [{transform_indices = @transform_0, window_bounds = array<i64: 1, 32, 64>}, {transform_indices = @transform_1, window_bounds = array<i64: 1, 24, 8>}, {transform_indices = @transform_2, window_bounds = array<i64: 1, 8, 24>}, {transform_indices = @transform_3, window_bounds = array<i64: 1, 1, 8>}, {transform_indices = @transform_4, window_bounds = array<i64: 1, 8, 1>}, {pipeline_mode = #tpu.pipeline_mode<synchronous>, transform_indices = @transform_5, window_bounds = array<i64: 64, 32>}, {pipeline_mode = #tpu.pipeline_mode<synchronous>, transform_indices = @transform_6, window_bounds = array<i64: 64, 1>}, {pipeline_mode = #tpu.pipeline_mode<synchronous>, transform_indices = @transform_7, window_bounds = array<i64: 32, 24>}, {pipeline_mode = #tpu.pipeline_mode<synchronous>, transform_indices = @transform_8, window_bounds = array<i64: 32, 1>}, {pipeline_mode = #tpu.pipeline_mode<synchronous>, transform_indices = @transform_9, window_bounds = array<i64: 24, 64>}, {pipeline_mode = #tpu.pipeline_mode<synchronous>, transform_indices = @transform_10, window_bounds = array<i64: 1, 64>}, {pipeline_mode = #tpu.pipeline_mode<synchronous>, transform_indices = @transform_11, window_bounds = array<i64: 32, 32>}, {pipeline_mode = #tpu.pipeline_mode<synchronous>, transform_indices = @transform_12, window_bounds = array<i64: 32, 1>}, {pipeline_mode = #tpu.pipeline_mode<synchronous>, transform_indices = @transform_13, window_bounds = array<i64: 32, 32>}, {pipeline_mode = #tpu.pipeline_mode<synchronous>, transform_indices = @transform_14, window_bounds = array<i64: 32, 1>}, {pipeline_mode = #tpu.pipeline_mode<synchronous>, transform_indices = @transform_15, window_bounds = array<i64: 64, 64>}, {transform_indices = @transform_16, window_bounds = array<i64: 1, 32, 64>}, {transform_indices = @transform_17, window_bounds = array<i64: 1, 8, 32>}]} {
    %c0 = arith.constant 0 : index
    %c0_0 = arith.constant 0 : index
    %c0_1 = arith.constant 0 : index
    %0 = vector.load %arg1[%c0, %c0_0, %c0_1] : memref<1x32x64xbf16, #tpu.memory_space<vmem>>, vector<1x32x64xbf16>
    %1 = vector.shape_cast %0 : vector<1x32x64xbf16> to vector<32x64xbf16>
    %c0_2 = arith.constant 0 : index
    %c0_3 = arith.constant 0 : index
    %c0_4 = arith.constant 0 : index
    %2 = vector.load %arg2[%c0_2, %c0_3, %c0_4] : memref<1x24x8xbf16, #tpu.memory_space<vmem>>, vector<1x24x8xbf16>
    %3 = vector.shape_cast %2 : vector<1x24x8xbf16> to vector<24x8xbf16>
    %c0_5 = arith.constant 0 : index
    %c0_6 = arith.constant 0 : index
    %c0_7 = arith.constant 0 : index
    %4 = vector.load %arg3[%c0_5, %c0_6, %c0_7] : memref<1x8x24xbf16, #tpu.memory_space<vmem>>, vector<1x8x24xbf16>
    %5 = vector.shape_cast %4 : vector<1x8x24xbf16> to vector<8x24xbf16>
    %c0_8 = arith.constant 0 : index
    %c0_9 = arith.constant 0 : index
    %c0_10 = arith.constant 0 : index
    %6 = vector.load %arg4[%c0_8, %c0_9, %c0_10] : memref<1x1x8xf32, #tpu.memory_space<vmem>>, vector<1x1x8xf32>
    %7 = vector.shape_cast %6 : vector<1x1x8xf32> to vector<1x8xf32>
    %c0_11 = arith.constant 0 : index
    %c0_12 = arith.constant 0 : index
    %c0_13 = arith.constant 0 : index
    %8 = vector.load %arg5[%c0_11, %c0_12, %c0_13] : memref<1x8x1xf32, #tpu.memory_space<vmem>>, vector<1x8x1xf32>
    %9 = vector.shape_cast %8 : vector<1x8x1xf32> to vector<8x1xf32>
    %c0_14 = arith.constant 0 : index
    %c0_15 = arith.constant 0 : index
    %10 = vector.load %arg6[%c0_14, %c0_15] : memref<64x32xbf16, #tpu.memory_space<vmem>>, vector<64x32xbf16>
    %cst = arith.constant dense<0.000000e+00> : vector<64x64xf32>
    %11 = tpu.matmul %10, %1, %cst {dimension_numbers = #tpu.dot_dimension_numbers<[1], [0], [0], [1], [0, 0, 1, 1], [], []>} : vector<64x32xbf16>, vector<32x64xbf16>, vector<64x64xf32> -> vector<64x64xf32>
    %c0_16 = arith.constant 0 : index
    %c0_17 = arith.constant 0 : index
    %12 = vector.load %arg7[%c0_16, %c0_17] : memref<64x1xf32, #tpu.memory_space<vmem>>, vector<64x1xf32>
    %13 = vector.broadcast %12 : vector<64x1xf32> to vector<64x64xf32>
    %14 = arith.addf %11, %13 : vector<64x64xf32>
    %15 = vector.extract_strided_slice %14 {offsets = [0, 0], sizes = [32, 64], strides = [1, 1]} : vector<64x64xf32> to vector<32x64xf32>
    %cst_18 = arith.constant 0.000000e+00 : f32
    %16 = vector.broadcast %cst_18 : f32 to vector<32x64xf32>
    %17 = arith.maximumf %15, %16 : vector<32x64xf32>
    %18 = vector.extract_strided_slice %14 {offsets = [32, 0], sizes = [32, 64], strides = [1, 1]} : vector<64x64xf32> to vector<32x64xf32>
    %cst_19 = arith.constant dense<0.000000e+00> : vector<32xf32>
    %19 = vector.multi_reduction <add>, %18, %cst_19 [1] : vector<32x64xf32> to vector<32xf32>
    %20 = vector.shape_cast %19 : vector<32xf32> to vector<32x1xf32>
    %cst_20 = arith.constant 6.400000e+01 : f32
    %21 = vector.broadcast %cst_20 : f32 to vector<32x1xf32>
    %22 = arith.divf %20, %21 : vector<32x1xf32>
    %23 = vector.broadcast %22 : vector<32x1xf32> to vector<32x64xf32>
    %24 = arith.subf %18, %23 : vector<32x64xf32>
    %25 = arith.mulf %24, %24 : vector<32x64xf32>
    %cst_21 = arith.constant dense<0.000000e+00> : vector<32xf32>
    %26 = vector.multi_reduction <add>, %25, %cst_21 [1] : vector<32x64xf32> to vector<32xf32>
    %27 = vector.shape_cast %26 : vector<32xf32> to vector<32x1xf32>
    %cst_22 = arith.constant 6.400000e+01 : f32
    %28 = vector.broadcast %cst_22 : f32 to vector<32x1xf32>
    %29 = arith.divf %27, %28 : vector<32x1xf32>
    %cst_23 = arith.constant 9.99999974E-6 : f32
    %30 = vector.broadcast %cst_23 : f32 to vector<32x1xf32>
    %31 = arith.addf %29, %30 : vector<32x1xf32>
    %32 = math.rsqrt %31 : vector<32x1xf32>
    %33 = vector.broadcast %32 : vector<32x1xf32> to vector<32x64xf32>
    %34 = arith.mulf %24, %33 : vector<32x64xf32>
    %c0_24 = arith.constant 0 : index
    %c0_25 = arith.constant 0 : index
    %35 = vector.load %arg8[%c0_24, %c0_25] : memref<32x24xbf16, #tpu.memory_space<vmem>>, vector<32x24xbf16>
    %cst_26 = arith.constant dense<0.000000e+00> : vector<32x8xf32>
    %36 = tpu.matmul %35, %3, %cst_26 {dimension_numbers = #tpu.dot_dimension_numbers<[1], [0], [0], [1], [0, 0, 1, 1], [], []>} : vector<32x24xbf16>, vector<24x8xbf16>, vector<32x8xf32> -> vector<32x8xf32>
    %c0_27 = arith.constant 0 : index
    %c0_28 = arith.constant 0 : index
    %37 = vector.load %arg9[%c0_27, %c0_28] : memref<32x1xf32, #tpu.memory_space<vmem>>, vector<32x1xf32>
    %38 = vector.broadcast %37 : vector<32x1xf32> to vector<32x8xf32>
    %39 = arith.addf %36, %38 : vector<32x8xf32>
    %40 = vector.broadcast %7 : vector<1x8xf32> to vector<32x8xf32>
    %41 = arith.mulf %39, %40 : vector<32x8xf32>
    %c0_29 = arith.constant 0 : index
    %c0_30 = arith.constant 0 : index
    %42 = vector.load %arg10[%c0_29, %c0_30] : memref<24x64xbf16, #tpu.memory_space<vmem>>, vector<24x64xbf16>
    %cst_31 = arith.constant dense<0.000000e+00> : vector<8x64xf32>
    %43 = tpu.matmul %5, %42, %cst_31 {dimension_numbers = #tpu.dot_dimension_numbers<[1], [0], [0], [1], [0, 0, 1, 1], [], []>} : vector<8x24xbf16>, vector<24x64xbf16>, vector<8x64xf32> -> vector<8x64xf32>
    %c0_32 = arith.constant 0 : index
    %c0_33 = arith.constant 0 : index
    %44 = vector.load %arg11[%c0_32, %c0_33] : memref<1x64xf32, #tpu.memory_space<vmem>>, vector<1x64xf32>
    %45 = vector.broadcast %44 : vector<1x64xf32> to vector<8x64xf32>
    %46 = arith.addf %43, %45 : vector<8x64xf32>
    %47 = vector.broadcast %9 : vector<8x1xf32> to vector<8x64xf32>
    %48 = arith.mulf %46, %47 : vector<8x64xf32>
    %49 = vector.extract_strided_slice %48 {offsets = [0, 0], sizes = [8, 32], strides = [1, 1]} : vector<8x64xf32> to vector<8x32xf32>
    %50 = vector.extract_strided_slice %48 {offsets = [0, 32], sizes = [8, 32], strides = [1, 1]} : vector<8x64xf32> to vector<8x32xf32>
    %cst_34 = arith.constant 1.000000e+04 : f32
    %51 = vector.broadcast %cst_34 : f32 to vector<8x1xf32>
    %52 = arith.mulf %51, %9 : vector<8x1xf32>
    %cst_35 = arith.constant 1.000000e+04 : f32
    %53 = vector.broadcast %cst_35 : f32 to vector<8x1xf32>
    %54 = arith.subf %52, %53 : vector<8x1xf32>
    %55 = vector.extract_strided_slice %49 {offsets = [0, 0], sizes = [8, 16], strides = [1, 1]} : vector<8x32xf32> to vector<8x16xf32>
    %56 = vector.extract_strided_slice %34 {offsets = [0, 0], sizes = [16, 64], strides = [1, 1]} : vector<32x64xf32> to vector<16x64xf32>
    %cst_36 = arith.constant dense<0.000000e+00> : vector<8x64xf32>
    %57 = tpu.matmul %55, %56, %cst_36 {dimension_numbers = #tpu.dot_dimension_numbers<[1], [0], [0], [1], [0, 0, 1, 1], [], []>} : vector<8x16xf32>, vector<16x64xf32>, vector<8x64xf32> -> vector<8x64xf32>
    %cst_37 = arith.constant 0.176776692 : f32
    %58 = vector.broadcast %cst_37 : f32 to vector<8x64xf32>
    %59 = arith.mulf %57, %58 : vector<8x64xf32>
    %60 = vector.broadcast %54 : vector<8x1xf32> to vector<8x64xf32>
    %61 = arith.addf %59, %60 : vector<8x64xf32>
    %cst_38 = arith.constant dense<0xFF800000> : vector<64xf32>
    %62 = vector.multi_reduction <maximumf>, %61, %cst_38 [0] : vector<8x64xf32> to vector<64xf32>
    %63 = vector.shape_cast %62 : vector<64xf32> to vector<1x64xf32>
    %64 = vector.broadcast %63 : vector<1x64xf32> to vector<8x64xf32>
    %65 = arith.subf %61, %64 : vector<8x64xf32>
    %66 = math.exp %65 : vector<8x64xf32>
    %cst_39 = arith.constant dense<0.000000e+00> : vector<64xf32>
    %67 = vector.multi_reduction <add>, %66, %cst_39 [0] : vector<8x64xf32> to vector<64xf32>
    %68 = vector.shape_cast %67 : vector<64xf32> to vector<1x64xf32>
    %69 = tpu.reciprocal %68 {approx = true} : vector<1x64xf32> -> vector<1x64xf32>
    %70 = vector.broadcast %69 : vector<1x64xf32> to vector<8x64xf32>
    %71 = arith.mulf %66, %70 : vector<8x64xf32>
    %cst_40 = arith.constant dense<0.000000e+00> : vector<8xf32>
    %72 = vector.multi_reduction <add>, %71, %cst_40 [1] : vector<8x64xf32> to vector<8xf32>
    %73 = vector.shape_cast %72 : vector<8xf32> to vector<8x1xf32>
    %cst_41 = arith.constant 1.562500e-02 : f32
    %74 = vector.broadcast %cst_41 : f32 to vector<8x1xf32>
    %75 = arith.mulf %73, %74 : vector<8x1xf32>
    %76 = vector.extract_strided_slice %50 {offsets = [0, 0], sizes = [8, 16], strides = [1, 1]} : vector<8x32xf32> to vector<8x16xf32>
    %77 = vector.broadcast %75 : vector<8x1xf32> to vector<8x16xf32>
    %78 = arith.mulf %77, %76 : vector<8x16xf32>
    %c0_42 = arith.constant 0 : index
    %c0_43 = arith.constant 0 : index
    %c0_44 = arith.constant 0 : index
    %79 = vector.load %arg18[%c0_42, %c0_43, %c0_44] : memref<1x8x32xf32, #tpu.memory_space<vmem>>, vector<1x8x16xf32>
    %80 = vector.shape_cast %79 : vector<1x8x16xf32> to vector<8x16xf32>
    %81 = vector.shape_cast %78 : vector<8x16xf32> to vector<1x8x16xf32>
    tpu.vector_store %arg18[%c0_42, %c0_43, %c0_44], %81 {strides = array<i32>} : memref<1x8x32xf32, #tpu.memory_space<vmem>>, vector<1x8x16xf32>,
    %82 = vector.extract_strided_slice %41 {offsets = [0, 0], sizes = [16, 8], strides = [1, 1]} : vector<32x8xf32> to vector<16x8xf32>
    %cst_45 = arith.constant dense<0.000000e+00> : vector<16x64xf32>
    %83 = tpu.matmul %82, %71, %cst_45 {dimension_numbers = #tpu.dot_dimension_numbers<[1], [0], [0], [1], [0, 0, 1, 1], [], []>} : vector<16x8xf32>, vector<8x64xf32>, vector<16x64xf32> -> vector<16x64xf32>
    %c0_46 = arith.constant 0 : index
    %c0_47 = arith.constant 0 : index
    %84 = vector.load %arg19[%c0_46, %c0_47] : memref<32x64xf32, #tpu.memory_space<vmem>>, vector<16x64xf32>
    tpu.vector_store %arg19[%c0_46, %c0_47], %83 {strides = array<i32>} : memref<32x64xf32, #tpu.memory_space<vmem>>, vector<16x64xf32>,
    %85 = vector.extract_strided_slice %49 {offsets = [0, 16], sizes = [8, 16], strides = [1, 1]} : vector<8x32xf32> to vector<8x16xf32>
    %86 = vector.extract_strided_slice %34 {offsets = [16, 0], sizes = [16, 64], strides = [1, 1]} : vector<32x64xf32> to vector<16x64xf32>
    %cst_48 = arith.constant dense<0.000000e+00> : vector<8x64xf32>
    %87 = tpu.matmul %85, %86, %cst_48 {dimension_numbers = #tpu.dot_dimension_numbers<[1], [0], [0], [1], [0, 0, 1, 1], [], []>} : vector<8x16xf32>, vector<16x64xf32>, vector<8x64xf32> -> vector<8x64xf32>
    %cst_49 = arith.constant 0.176776692 : f32
    %88 = vector.broadcast %cst_49 : f32 to vector<8x64xf32>
    %89 = arith.mulf %87, %88 : vector<8x64xf32>
    %90 = vector.broadcast %54 : vector<8x1xf32> to vector<8x64xf32>
    %91 = arith.addf %89, %90 : vector<8x64xf32>
    %cst_50 = arith.constant dense<0xFF800000> : vector<64xf32>
    %92 = vector.multi_reduction <maximumf>, %91, %cst_50 [0] : vector<8x64xf32> to vector<64xf32>
    %93 = vector.shape_cast %92 : vector<64xf32> to vector<1x64xf32>
    %94 = vector.broadcast %93 : vector<1x64xf32> to vector<8x64xf32>
    %95 = arith.subf %91, %94 : vector<8x64xf32>
    %96 = math.exp %95 : vector<8x64xf32>
    %cst_51 = arith.constant dense<0.000000e+00> : vector<64xf32>
    %97 = vector.multi_reduction <add>, %96, %cst_51 [0] : vector<8x64xf32> to vector<64xf32>
    %98 = vector.shape_cast %97 : vector<64xf32> to vector<1x64xf32>
    %99 = tpu.reciprocal %98 {approx = true} : vector<1x64xf32> -> vector<1x64xf32>
    %100 = vector.broadcast %99 : vector<1x64xf32> to vector<8x64xf32>
    %101 = arith.mulf %96, %100 : vector<8x64xf32>
    %cst_52 = arith.constant dense<0.000000e+00> : vector<8xf32>
    %102 = vector.multi_reduction <add>, %101, %cst_52 [1] : vector<8x64xf32> to vector<8xf32>
    %103 = vector.shape_cast %102 : vector<8xf32> to vector<8x1xf32>
    %cst_53 = arith.constant 1.562500e-02 : f32
    %104 = vector.broadcast %cst_53 : f32 to vector<8x1xf32>
    %105 = arith.mulf %103, %104 : vector<8x1xf32>
    %106 = vector.extract_strided_slice %50 {offsets = [0, 16], sizes = [8, 16], strides = [1, 1]} : vector<8x32xf32> to vector<8x16xf32>
    %107 = vector.broadcast %105 : vector<8x1xf32> to vector<8x16xf32>
    %108 = arith.mulf %107, %106 : vector<8x16xf32>
    %c0_54 = arith.constant 0 : index
    %c0_55 = arith.constant 0 : index
    %c16 = arith.constant 16 : index
    %109 = vector.load %arg18[%c0_54, %c0_55, %c16] : memref<1x8x32xf32, #tpu.memory_space<vmem>>, vector<1x8x16xf32>
    %110 = vector.shape_cast %109 : vector<1x8x16xf32> to vector<8x16xf32>
    %111 = vector.shape_cast %108 : vector<8x16xf32> to vector<1x8x16xf32>
    tpu.vector_store %arg18[%c0_54, %c0_55, %c16], %111 {strides = array<i32>} : memref<1x8x32xf32, #tpu.memory_space<vmem>>, vector<1x8x16xf32>,
    %112 = vector.extract_strided_slice %41 {offsets = [16, 0], sizes = [16, 8], strides = [1, 1]} : vector<32x8xf32> to vector<16x8xf32>
    %cst_56 = arith.constant dense<0.000000e+00> : vector<16x64xf32>
    %113 = tpu.matmul %112, %101, %cst_56 {dimension_numbers = #tpu.dot_dimension_numbers<[1], [0], [0], [1], [0, 0, 1, 1], [], []>} : vector<16x8xf32>, vector<8x64xf32>, vector<16x64xf32> -> vector<16x64xf32>
    %c16_57 = arith.constant 16 : index
    %c0_58 = arith.constant 0 : index
    %114 = vector.load %arg19[%c16_57, %c0_58] : memref<32x64xf32, #tpu.memory_space<vmem>>, vector<16x64xf32>
    tpu.vector_store %arg19[%c16_57, %c0_58], %113 {strides = array<i32>} : memref<32x64xf32, #tpu.memory_space<vmem>>, vector<16x64xf32>,
    %c0_59 = arith.constant 0 : index
    %c0_60 = arith.constant 0 : index
    %115 = vector.load %arg12[%c0_59, %c0_60] : memref<32x32xbf16, #tpu.memory_space<vmem>>, vector<32x32xbf16>
    %c0_61 = arith.constant 0 : index
    %c0_62 = arith.constant 0 : index
    %116 = vector.load %arg19[%c0_61, %c0_62] : memref<32x64xf32, #tpu.memory_space<vmem>>, vector<32x64xf32>
    %117 = arith.truncf %116 : vector<32x64xf32> to vector<32x64xbf16>
    %cst_63 = arith.constant dense<0.000000e+00> : vector<32x64xf32>
    %118 = tpu.matmul %115, %117, %cst_63 {dimension_numbers = #tpu.dot_dimension_numbers<[1], [0], [0], [1], [0, 0, 1, 1], [], []>} : vector<32x32xbf16>, vector<32x64xbf16>, vector<32x64xf32> -> vector<32x64xf32>
    %c0_64 = arith.constant 0 : index
    %c0_65 = arith.constant 0 : index
    %119 = vector.load %arg13[%c0_64, %c0_65] : memref<32x1xf32, #tpu.memory_space<vmem>>, vector<32x1xf32>
    %120 = vector.broadcast %119 : vector<32x1xf32> to vector<32x64xf32>
    %121 = arith.addf %118, %120 : vector<32x64xf32>
    %cst_66 = arith.constant dense<0.000000e+00> : vector<32xf32>
    %122 = vector.multi_reduction <add>, %121, %cst_66 [1] : vector<32x64xf32> to vector<32xf32>
    %123 = vector.shape_cast %122 : vector<32xf32> to vector<32x1xf32>
    %cst_67 = arith.constant 6.400000e+01 : f32
    %124 = vector.broadcast %cst_67 : f32 to vector<32x1xf32>
    %125 = arith.divf %123, %124 : vector<32x1xf32>
    %126 = vector.broadcast %125 : vector<32x1xf32> to vector<32x64xf32>
    %127 = arith.subf %121, %126 : vector<32x64xf32>
    %128 = arith.mulf %127, %127 : vector<32x64xf32>
    %cst_68 = arith.constant dense<0.000000e+00> : vector<32xf32>
    %129 = vector.multi_reduction <add>, %128, %cst_68 [1] : vector<32x64xf32> to vector<32xf32>
    %130 = vector.shape_cast %129 : vector<32xf32> to vector<32x1xf32>
    %cst_69 = arith.constant 6.400000e+01 : f32
    %131 = vector.broadcast %cst_69 : f32 to vector<32x1xf32>
    %132 = arith.divf %130, %131 : vector<32x1xf32>
    %cst_70 = arith.constant 9.99999974E-6 : f32
    %133 = vector.broadcast %cst_70 : f32 to vector<32x1xf32>
    %134 = arith.addf %132, %133 : vector<32x1xf32>
    %135 = math.rsqrt %134 : vector<32x1xf32>
    %136 = vector.broadcast %135 : vector<32x1xf32> to vector<32x64xf32>
    %137 = arith.mulf %127, %136 : vector<32x64xf32>
    %138 = arith.mulf %17, %137 : vector<32x64xf32>
    %139 = arith.truncf %138 : vector<32x64xf32> to vector<32x64xbf16>
    %c0_71 = arith.constant 0 : index
    %c0_72 = arith.constant 0 : index
    %140 = vector.load %arg14[%c0_71, %c0_72] : memref<32x32xbf16, #tpu.memory_space<vmem>>, vector<32x32xbf16>
    %cst_73 = arith.constant dense<0.000000e+00> : vector<32x64xf32>
    %141 = tpu.matmul %140, %139, %cst_73 {dimension_numbers = #tpu.dot_dimension_numbers<[1], [0], [0], [1], [0, 0, 1, 1], [], []>} : vector<32x32xbf16>, vector<32x64xbf16>, vector<32x64xf32> -> vector<32x64xf32>
    %c0_74 = arith.constant 0 : index
    %c0_75 = arith.constant 0 : index
    %142 = vector.load %arg15[%c0_74, %c0_75] : memref<32x1xf32, #tpu.memory_space<vmem>>, vector<32x1xf32>
    %143 = vector.broadcast %142 : vector<32x1xf32> to vector<32x64xf32>
    %144 = arith.addf %141, %143 : vector<32x64xf32>
    %cst_76 = arith.constant 0.000000e+00 : f32
    %145 = vector.broadcast %cst_76 : f32 to vector<32x64xf32>
    %146 = arith.maximumf %144, %145 : vector<32x64xf32>
    %147 = arith.truncf %146 : vector<32x64xf32> to vector<32x64xbf16>
    %c0_77 = arith.constant 0 : index
    %c0_78 = arith.constant 0 : index
    %c0_79 = arith.constant 0 : index
    %148 = vector.load %arg17[%c0_77, %c0_78, %c0_79] : memref<1x32x64xbf16, #tpu.memory_space<vmem>>, vector<1x32x64xbf16>
    %149 = vector.shape_cast %148 : vector<1x32x64xbf16> to vector<32x64xbf16>
    %150 = vector.shape_cast %147 : vector<32x64xbf16> to vector<1x32x64xbf16>
    tpu.vector_store %arg17[%c0_77, %c0_78, %c0_79], %150 {strides = array<i32>} : memref<1x32x64xbf16, #tpu.memory_space<vmem>>, vector<1x32x64xbf16>,
    return
  }
  func.func @transform_0(%arg0: i32) -> (i32, i32, i32) {
    %c0_i32 = arith.constant 0 : i32
    %c0_i32_0 = arith.constant 0 : i32
    %c0_i32_1 = arith.constant 0 : i32
    return %arg0, %c0_i32, %c0_i32_0 : i32, i32, i32
  }
  func.func @transform_1(%arg0: i32) -> (i32, i32, i32) {
    %c0_i32 = arith.constant 0 : i32
    %c0_i32_0 = arith.constant 0 : i32
    %c0_i32_1 = arith.constant 0 : i32
    return %arg0, %c0_i32, %c0_i32_0 : i32, i32, i32
  }
  func.func @transform_2(%arg0: i32) -> (i32, i32, i32) {
    %c0_i32 = arith.constant 0 : i32
    %c0_i32_0 = arith.constant 0 : i32
    %c0_i32_1 = arith.constant 0 : i32
    return %arg0, %c0_i32, %c0_i32_0 : i32, i32, i32
  }
  func.func @transform_3(%arg0: i32) -> (i32, i32, i32) {
    %c0_i32 = arith.constant 0 : i32
    %c0_i32_0 = arith.constant 0 : i32
    %c0_i32_1 = arith.constant 0 : i32
    return %arg0, %c0_i32, %c0_i32_0 : i32, i32, i32
  }
  func.func @transform_4(%arg0: i32) -> (i32, i32, i32) {
    %c0_i32 = arith.constant 0 : i32
    %c0_i32_0 = arith.constant 0 : i32
    %c0_i32_1 = arith.constant 0 : i32
    return %arg0, %c0_i32, %c0_i32_0 : i32, i32, i32
  }
  func.func @transform_5(%arg0: i32) -> (i32, i32) {
    %c0_i32 = arith.constant 0 : i32
    %c0_i32_0 = arith.constant 0 : i32
    %c0_i32_1 = arith.constant 0 : i32
    return %c0_i32, %c0_i32_0 : i32, i32
  }
  func.func @transform_6(%arg0: i32) -> (i32, i32) {
    %c0_i32 = arith.constant 0 : i32
    %c0_i32_0 = arith.constant 0 : i32
    %c0_i32_1 = arith.constant 0 : i32
    return %c0_i32, %c0_i32_0 : i32, i32
  }
  func.func @transform_7(%arg0: i32) -> (i32, i32) {
    %c0_i32 = arith.constant 0 : i32
    %c0_i32_0 = arith.constant 0 : i32
    %c0_i32_1 = arith.constant 0 : i32
    return %c0_i32, %c0_i32_0 : i32, i32
  }
  func.func @transform_8(%arg0: i32) -> (i32, i32) {
    %c0_i32 = arith.constant 0 : i32
    %c0_i32_0 = arith.constant 0 : i32
    %c0_i32_1 = arith.constant 0 : i32
    return %c0_i32, %c0_i32_0 : i32, i32
  }
  func.func @transform_9(%arg0: i32) -> (i32, i32) {
    %c0_i32 = arith.constant 0 : i32
    %c0_i32_0 = arith.constant 0 : i32
    %c0_i32_1 = arith.constant 0 : i32
    return %c0_i32, %c0_i32_0 : i32, i32
  }
  func.func @transform_10(%arg0: i32) -> (i32, i32) {
    %c0_i32 = arith.constant 0 : i32
    %c0_i32_0 = arith.constant 0 : i32
    %c0_i32_1 = arith.constant 0 : i32
    return %c0_i32, %c0_i32_0 : i32, i32
  }
  func.func @transform_11(%arg0: i32) -> (i32, i32) {
    %c0_i32 = arith.constant 0 : i32
    %c0_i32_0 = arith.constant 0 : i32
    %c0_i32_1 = arith.constant 0 : i32
    return %c0_i32, %c0_i32_0 : i32, i32
  }
  func.func @transform_12(%arg0: i32) -> (i32, i32) {
    %c0_i32 = arith.constant 0 : i32
    %c0_i32_0 = arith.constant 0 : i32
    %c0_i32_1 = arith.constant 0 : i32
    return %c0_i32, %c0_i32_0 : i32, i32
  }
  func.func @transform_13(%arg0: i32) -> (i32, i32) {
    %c0_i32 = arith.constant 0 : i32
    %c0_i32_0 = arith.constant 0 : i32
    %c0_i32_1 = arith.constant 0 : i32
    return %c0_i32, %c0_i32_0 : i32, i32
  }
  func.func @transform_14(%arg0: i32) -> (i32, i32) {
    %c0_i32 = arith.constant 0 : i32
    %c0_i32_0 = arith.constant 0 : i32
    %c0_i32_1 = arith.constant 0 : i32
    return %c0_i32, %c0_i32_0 : i32, i32
  }
  func.func @transform_15(%arg0: i32) -> (i32, i32) {
    %c0_i32 = arith.constant 0 : i32
    %c0_i32_0 = arith.constant 0 : i32
    %c0_i32_1 = arith.constant 0 : i32
    return %c0_i32, %c0_i32_0 : i32, i32
  }
  func.func @transform_16(%arg0: i32) -> (i32, i32, i32) {
    %c0_i32 = arith.constant 0 : i32
    %c0_i32_0 = arith.constant 0 : i32
    %c0_i32_1 = arith.constant 0 : i32
    return %arg0, %c0_i32, %c0_i32_0 : i32, i32, i32
  }
  func.func @transform_17(%arg0: i32) -> (i32, i32, i32) {
    %c0_i32 = arith.constant 0 : i32
    %c0_i32_0 = arith.constant 0 : i32
    %c0_i32_1 = arith.constant 0 : i32
    return %arg0, %c0_i32, %c0_i32_0 : i32, i32, i32
  }
}

</mosaic_0001>

<llo_original>
// kernel: tpu_custom_call.1
$region0: #{tpu_custom_call.1}
  #allocation0 [shape = 'u32[]', space=smem, size = 0x4, offset = 0x4, fixed_abs, tag = 'smem constant byte address 0x4 - core index']
  #allocation1 [shape = 'u32[144,128]{1,0:T(1,128)}', space=vmem, size = 0x12000, scoped, tag = 'internal scratch']
  #allocation2 [shape = 'f32[32,64]{1,0:T(8,128)}', space=vmem, size = 0x4000, scoped, tag = 'scratch operand']
  %s0 = inlined_call_operand.vmem [shape: bf16[2,32,64], index: 0, kind: input, shape index: {}]
  %s1 = inlined_call_operand.vmem [shape: bf16[2,24,8], index: 1, kind: input, shape index: {}]
  %s2 = inlined_call_operand.vmem [shape: bf16[2,8,24], index: 2, kind: input, shape index: {}]
  %s3 = inlined_call_operand.vmem [shape: f32[2,1,8], index: 3, kind: input, shape index: {}]
  %s4 = inlined_call_operand.vmem [shape: f32[2,8,1], index: 4, kind: input, shape index: {}]
  %s5 = inlined_call_operand.vmem [shape: bf16[64,32], index: 5, kind: input, shape index: {}]
  %s6 = inlined_call_operand.vmem [shape: f32[64,1], index: 6, kind: input, shape index: {}]
  %s7 = inlined_call_operand.vmem [shape: bf16[32,24], index: 7, kind: input, shape index: {}]
  %s8 = inlined_call_operand.vmem [shape: f32[32,1], index: 8, kind: input, shape index: {}]
  %s9 = inlined_call_operand.vmem [shape: bf16[24,64], index: 9, kind: input, shape index: {}]
  %s10 = inlined_call_operand.vmem [shape: f32[1,64], index: 10, kind: input, shape index: {}]
  %s11 = inlined_call_operand.vmem [shape: bf16[32,32], index: 11, kind: input, shape index: {}]
  %s12 = inlined_call_operand.vmem [shape: f32[32,1], index: 12, kind: input, shape index: {}]
  %s13 = inlined_call_operand.vmem [shape: bf16[32,32], index: 13, kind: input, shape index: {}]
  %s14 = inlined_call_operand.vmem [shape: f32[32,1], index: 14, kind: input, shape index: {}]
  %s15 = inlined_call_operand.vmem [shape: f32[64,64], index: 15, kind: input, shape index: {}]
  %s16 = inlined_call_operand.hbm [shape: bf16[2,32,64], index: 16, kind: output, shape index: {0}]
  %s17 = inlined_call_operand.hbm [shape: f32[2,8,32], index: 17, kind: output, shape index: {1}]
  %18 = xla_tuple %s16, %s17
  %s19 = sld [smem:[#allocation0]]
  $region105: #{tpu_custom_call.1} parent=0
    _
  %s21 = ssub.s32 1, %s19
  %s22 = scalar_select 0, %s21, %s19
  $region1: #{tpu_custom_call.1} parent=0
    #allocation3 [shape = 'u8[16384]{0}', space=vmem, size = 0x4000, scoped, tag = 'output window, operand 0']
    #allocation4 [shape = 's32[2]{0}', space=sflag, size = 0x8, scoped, tag = 'scoped memory for tpu_custom_call.1']
    #allocation5 [shape = 'u8[8192]{0}', space=vmem, size = 0x2000, scoped, tag = 'output window, operand 1']
    #allocation6 [shape = 's32[2]{0}', space=sflag, size = 0x8, scoped, tag = 'scoped memory for tpu_custom_call.1']
    %23 = vsyncpa [#allocation4], 0
    %s24 = scalar_lea.sflag [#allocation4], 1
    %25 = vsyncpa %s24, 0
    %26 = vsyncpa [#allocation6], 0
    %s27 = scalar_lea.sflag [#allocation6], 1
    %28 = vsyncpa %s27, 0
    loop: start=0, step=1, limit=4
    $region2: #{tpu_custom_call.1} parent=1 // loop_pre_header
      _
    $region3: #{tpu_custom_call.1} parent=1 // loop_header
      %s30 = sphi 0, %s34
      %p31 = scmp.ge.s32.totalorder %s30, 4
      %s40 = sphi 0, %s42
      %s43 = sphi 0, %s40
      %s44 = sphi 0, %s43
      %s60 = sphi 0, %s44
      %s66 = sphi 0, %s68
      %s69 = sphi 0, %s66
      %s70 = sphi 0, %s69
      %s86 = sphi 0, %s70
      %s92 = sphi 0, %s94
      %s95 = sphi 0, %s92
      %s96 = sphi 0, %s95
      %s112 = sphi 0, %s96
      %s118 = sphi 0, %s120
      %s121 = sphi 0, %s118
      %s122 = sphi 0, %s121
      %s138 = sphi 0, %s122
      %s144 = sphi 0, %s146
      %s147 = sphi 0, %s144
      %s148 = sphi 0, %s147
      %s164 = sphi 0, %s148
      %s168 = sphi 0, %s168
      %s170 = sphi 0, %s168
      %s171 = sphi 0, %s170
      %s185 = sphi 0, %s171
      %s189 = sphi 0, %s189
      %s191 = sphi 0, %s189
      %s192 = sphi 0, %s191
      %s206 = sphi 0, %s192
      %s210 = sphi 0, %s210
      %s212 = sphi 0, %s210
      %s213 = sphi 0, %s212
      %s227 = sphi 0, %s213
      %s231 = sphi 0, %s231
      %s233 = sphi 0, %s231
      %s234 = sphi 0, %s233
      %s248 = sphi 0, %s234
      %s252 = sphi 0, %s252
      %s254 = sphi 0, %s252
      %s255 = sphi 0, %s254
      %s269 = sphi 0, %s255
      %s273 = sphi 0, %s273
      %s275 = sphi 0, %s273
      %s276 = sphi 0, %s275
      %s290 = sphi 0, %s276
      %s294 = sphi 0, %s294
      %s296 = sphi 0, %s294
      %s297 = sphi 0, %s296
      %s311 = sphi 0, %s297
      %s315 = sphi 0, %s315
      %s317 = sphi 0, %s315
      %s318 = sphi 0, %s317
      %s332 = sphi 0, %s318
      %s336 = sphi 0, %s336
      %s338 = sphi 0, %s336
      %s339 = sphi 0, %s338
      %s353 = sphi 0, %s339
      %s357 = sphi 0, %s357
      %s359 = sphi 0, %s357
      %s360 = sphi 0, %s359
      %s374 = sphi 0, %s360
      %s378 = sphi 0, %s378
      %s380 = sphi 0, %s378
      %s381 = sphi 0, %s380
      %s395 = sphi 0, %s381
      %s401 = sphi 0, %s403
      %s404 = sphi 0, %s401
      %s405 = sphi 0, %s404
      %s421 = sphi 0, %s405
      %s427 = sphi 0, %s429
      %s430 = sphi 0, %s427
      %s431 = sphi 0, %s430
      %s447 = sphi 0, %s431
    $region4: #{tpu_custom_call.1} parent=1 // loop_header_branch
      %33 = sbr.rel (%p31) target = $region8
    $region5: #{tpu_custom_call.1} parent=1 // loop_body
      %s35 = ssub.s32 %s30, 1
      %s36 = ssub.s32 %s30, 2
      %s37 = sadd.s32 %s30, 1
      %s38 = ssub.s32 %s30, %s37
      %p39 = scmp.eq.s32.totalorder %s38, 0
      %s41 = sadd.s32 %s40, 1
      %s42 = scalar_select %p39, %s40, %s41
      %p45 = pneg %p39
      %p46 = scmp.eq.s32.totalorder %s30, 1
      %p47 = por %p45, %p46
      %p48 = scmp.ne.s32.totalorder %s40, %s43
      %p49 = scmp.eq.s32.totalorder %s30, 0
      %p50 = por %p48, %p49
      %p51 = scmp.ne.s32.totalorder %s40, %s43
      %p52 = scmp.eq.s32.totalorder %s35, 1
      %p53 = por %p51, %p52
      %p54 = scmp.ne.s32.totalorder %s43, %s44
      %p55 = scmp.eq.s32.totalorder %s35, 0
      %p56 = por %p54, %p55
      %p57 = scmp.ne.s32.totalorder %s43, %s44
      %p58 = scmp.eq.s32.totalorder %s36, 1
      %p59 = por %p57, %p58
      %p61 = scmp.ne.s32.totalorder %s44, %s60
      %p62 = scmp.eq.s32.totalorder %s36, 0
      %p63 = por %p61, %p62
      %s64 = ssub.s32 %s30, %s37
      %p65 = scmp.eq.s32.totalorder %s64, 0
      %s67 = sadd.s32 %s66, 1
      %s68 = scalar_select %p65, %s66, %s67
      %p71 = pneg %p65
      %p72 = scmp.eq.s32.totalorder %s30, 1
      %p73 = por %p71, %p72
      %p74 = scmp.ne.s32.totalorder %s66, %s69
      %p75 = scmp.eq.s32.totalorder %s30, 0
      %p76 = por %p74, %p75
      %p77 = scmp.ne.s32.totalorder %s66, %s69
      %p78 = scmp.eq.s32.totalorder %s35, 1
      %p79 = por %p77, %p78
      %p80 = scmp.ne.s32.totalorder %s69, %s70
      %p81 = scmp.eq.s32.totalorder %s35, 0
      %p82 = por %p80, %p81
      %p83 = scmp.ne.s32.totalorder %s69, %s70
      %p84 = scmp.eq.s32.totalorder %s36, 1
      %p85 = por %p83, %p84
      %p87 = scmp.ne.s32.totalorder %s70, %s86
      %p88 = scmp.eq.s32.totalorder %s36, 0
      %p89 = por %p87, %p88
      %s90 = ssub.s32 %s30, %s37
      %p91 = scmp.eq.s32.totalorder %s90, 0
      %s93 = sadd.s32 %s92, 1
      %s94 = scalar_select %p91, %s92, %s93
      %p97 = pneg %p91
      %p98 = scmp.eq.s32.totalorder %s30, 1
      %p99 = por %p97, %p98
      %p100 = scmp.ne.s32.totalorder %s92, %s95
      %p101 = scmp.eq.s32.totalorder %s30, 0
      %p102 = por %p100, %p101
      %p103 = scmp.ne.s32.totalorder %s92, %s95
      %p104 = scmp.eq.s32.totalorder %s35, 1
      %p105 = por %p103, %p104
      %p106 = scmp.ne.s32.totalorder %s95, %s96
      %p107 = scmp.eq.s32.totalorder %s35, 0
      %p108 = por %p106, %p107
      %p109 = scmp.ne.s32.totalorder %s95, %s96
      %p110 = scmp.eq.s32.totalorder %s36, 1
      %p111 = por %p109, %p110
      %p113 = scmp.ne.s32.totalorder %s96, %s112
      %p114 = scmp.eq.s32.totalorder %s36, 0
      %p115 = por %p113, %p114
      %s116 = ssub.s32 %s30, %s37
      %p117 = scmp.eq.s32.totalorder %s116, 0
      %s119 = sadd.s32 %s118, 1
      %s120 = scalar_select %p117, %s118, %s119
      %p123 = pneg %p117
      %p124 = scmp.eq.s32.totalorder %s30, 1
      %p125 = por %p123, %p124
      %p126 = scmp.ne.s32.totalorder %s118, %s121
      %p127 = scmp.eq.s32.totalorder %s30, 0
      %p128 = por %p126, %p127
      %p129 = scmp.ne.s32.totalorder %s118, %s121
      %p130 = scmp.eq.s32.totalorder %s35, 1
      %p131 = por %p129, %p130
      %p132 = scmp.ne.s32.totalorder %s121, %s122
      %p133 = scmp.eq.s32.totalorder %s35, 0
      %p134 = por %p132, %p133
      %p135 = scmp.ne.s32.totalorder %s121, %s122
      %p136 = scmp.eq.s32.totalorder %s36, 1
      %p137 = por %p135, %p136
      %p139 = scmp.ne.s32.totalorder %s122, %s138
      %p140 = scmp.eq.s32.totalorder %s36, 0
      %p141 = por %p139, %p140
      %s142 = ssub.s32 %s30, %s37
      %p143 = scmp.eq.s32.totalorder %s142, 0
      %s145 = sadd.s32 %s144, 1
      %s146 = scalar_select %p143, %s144, %s145
      %p149 = pneg %p143
      %p150 = scmp.eq.s32.totalorder %s30, 1
      %p151 = por %p149, %p150
      %p152 = scmp.ne.s32.totalorder %s144, %s147
      %p153 = scmp.eq.s32.totalorder %s30, 0
      %p154 = por %p152, %p153
      %p155 = scmp.ne.s32.totalorder %s144, %s147
      %p156 = scmp.eq.s32.totalorder %s35, 1
      %p157 = por %p155, %p156
      %p158 = scmp.ne.s32.totalorder %s147, %s148
      %p159 = scmp.eq.s32.totalorder %s35, 0
      %p160 = por %p158, %p159
      %p161 = scmp.ne.s32.totalorder %s147, %s148
      %p162 = scmp.eq.s32.totalorder %s36, 1
      %p163 = por %p161, %p162
      %p165 = scmp.ne.s32.totalorder %s148, %s164
      %p166 = scmp.eq.s32.totalorder %s36, 0
      %p167 = por %p165, %p166
      %s169 = sadd.s32 %s168, 1
      %p172 = scmp.eq.s32.totalorder %s30, 1
      %p173 = scmp.ne.s32.totalorder %s168, %s170
      %p174 = scmp.eq.s32.totalorder %s30, 0
      %p175 = por %p173, %p174
      %p176 = scmp.ne.s32.totalorder %s168, %s170
      %p177 = scmp.eq.s32.totalorder %s35, 1
      %p178 = por %p176, %p177
      %p179 = scmp.ne.s32.totalorder %s170, %s171
      %p180 = scmp.eq.s32.totalorder %s35, 0
      %p181 = por %p179, %p180
      %p182 = scmp.ne.s32.totalorder %s170, %s171
      %p183 = scmp.eq.s32.totalorder %s36, 1
      %p184 = por %p182, %p183
      %p186 = scmp.ne.s32.totalorder %s171, %s185
      %p187 = scmp.eq.s32.totalorder %s36, 0
      %p188 = por %p186, %p187
      %s190 = sadd.s32 %s189, 1
      %p193 = scmp.eq.s32.totalorder %s30, 1
      %p194 = scmp.ne.s32.totalorder %s189, %s191
      %p195 = scmp.eq.s32.totalorder %s30, 0
      %p196 = por %p194, %p195
      %p197 = scmp.ne.s32.totalorder %s189, %s191
      %p198 = scmp.eq.s32.totalorder %s35, 1
      %p199 = por %p197, %p198
      %p200 = scmp.ne.s32.totalorder %s191, %s192
      %p201 = scmp.eq.s32.totalorder %s35, 0
      %p202 = por %p200, %p201
      %p203 = scmp.ne.s32.totalorder %s191, %s192
      %p204 = scmp.eq.s32.totalorder %s36, 1
      %p205 = por %p203, %p204
      %p207 = scmp.ne.s32.totalorder %s192, %s206
      %p208 = scmp.eq.s32.totalorder %s36, 0
      %p209 = por %p207, %p208
      %s211 = sadd.s32 %s210, 1
      %p214 = scmp.eq.s32.totalorder %s30, 1
      %p215 = scmp.ne.s32.totalorder %s210, %s212
      %p216 = scmp.eq.s32.totalorder %s30, 0
      %p217 = por %p215, %p216
      %p218 = scmp.ne.s32.totalorder %s210, %s212
      %p219 = scmp.eq.s32.totalorder %s35, 1
      %p220 = por %p218, %p219
      %p221 = scmp.ne.s32.totalorder %s212, %s213
      %p222 = scmp.eq.s32.totalorder %s35, 0
      %p223 = por %p221, %p222
      %p224 = scmp.ne.s32.totalorder %s212, %s213
      %p225 = scmp.eq.s32.totalorder %s36, 1
      %p226 = por %p224, %p225
      %p228 = scmp.ne.s32.totalorder %s213, %s227
      %p229 = scmp.eq.s32.totalorder %s36, 0
      %p230 = por %p228, %p229
      %s232 = sadd.s32 %s231, 1
      %p235 = scmp.eq.s32.totalorder %s30, 1
      %p236 = scmp.ne.s32.totalorder %s231, %s233
      %p237 = scmp.eq.s32.totalorder %s30, 0
      %p238 = por %p236, %p237
      %p239 = scmp.ne.s32.totalorder %s231, %s233
      %p240 = scmp.eq.s32.totalorder %s35, 1
      %p241 = por %p239, %p240
      %p242 = scmp.ne.s32.totalorder %s233, %s234
      %p243 = scmp.eq.s32.totalorder %s35, 0
      %p244 = por %p242, %p243
      %p245 = scmp.ne.s32.totalorder %s233, %s234
      %p246 = scmp.eq.s32.totalorder %s36, 1
      %p247 = por %p245, %p246
      %p249 = scmp.ne.s32.totalorder %s234, %s248
      %p250 = scmp.eq.s32.totalorder %s36, 0
      %p251 = por %p249, %p250
      %s253 = sadd.s32 %s252, 1
      %p256 = scmp.eq.s32.totalorder %s30, 1
      %p257 = scmp.ne.s32.totalorder %s252, %s254
      %p258 = scmp.eq.s32.totalorder %s30, 0
      %p259 = por %p257, %p258
      %p260 = scmp.ne.s32.totalorder %s252, %s254
      %p261 = scmp.eq.s32.totalorder %s35, 1
      %p262 = por %p260, %p261
      %p263 = scmp.ne.s32.totalorder %s254, %s255
      %p264 = scmp.eq.s32.totalorder %s35, 0
      %p265 = por %p263, %p264
      %p266 = scmp.ne.s32.totalorder %s254, %s255
      %p267 = scmp.eq.s32.totalorder %s36, 1
      %p268 = por %p266, %p267
      %p270 = scmp.ne.s32.totalorder %s255, %s269
      %p271 = scmp.eq.s32.totalorder %s36, 0
      %p272 = por %p270, %p271
      %s274 = sadd.s32 %s273, 1
      %p277 = scmp.eq.s32.totalorder %s30, 1
      %p278 = scmp.ne.s32.totalorder %s273, %s275
      %p279 = scmp.eq.s32.totalorder %s30, 0
      %p280 = por %p278, %p279
      %p281 = scmp.ne.s32.totalorder %s273, %s275
      %p282 = scmp.eq.s32.totalorder %s35, 1
      %p283 = por %p281, %p282
      %p284 = scmp.ne.s32.totalorder %s275, %s276
      %p285 = scmp.eq.s32.totalorder %s35, 0
      %p286 = por %p284, %p285
      %p287 = scmp.ne.s32.totalorder %s275, %s276
      %p288 = scmp.eq.s32.totalorder %s36, 1
      %p289 = por %p287, %p288
      %p291 = scmp.ne.s32.totalorder %s276, %s290
      %p292 = scmp.eq.s32.totalorder %s36, 0
      %p293 = por %p291, %p292
      %s295 = sadd.s32 %s294, 1
      %p298 = scmp.eq.s32.totalorder %s30, 1
      %p299 = scmp.ne.s32.totalorder %s294, %s296
      %p300 = scmp.eq.s32.totalorder %s30, 0
      %p301 = por %p299, %p300
      %p302 = scmp.ne.s32.totalorder %s294, %s296
      %p303 = scmp.eq.s32.totalorder %s35, 1
      %p304 = por %p302, %p303
      %p305 = scmp.ne.s32.totalorder %s296, %s297
      %p306 = scmp.eq.s32.totalorder %s35, 0
      %p307 = por %p305, %p306
      %p308 = scmp.ne.s32.totalorder %s296, %s297
      %p309 = scmp.eq.s32.totalorder %s36, 1
      %p310 = por %p308, %p309
      %p312 = scmp.ne.s32.totalorder %s297, %s311
      %p313 = scmp.eq.s32.totalorder %s36, 0
      %p314 = por %p312, %p313
      %s316 = sadd.s32 %s315, 1
      %p319 = scmp.eq.s32.totalorder %s30, 1
      %p320 = scmp.ne.s32.totalorder %s315, %s317
      %p321 = scmp.eq.s32.totalorder %s30, 0
      %p322 = por %p320, %p321
      %p323 = scmp.ne.s32.totalorder %s315, %s317
      %p324 = scmp.eq.s32.totalorder %s35, 1
      %p325 = por %p323, %p324
      %p326 = scmp.ne.s32.totalorder %s317, %s318
      %p327 = scmp.eq.s32.totalorder %s35, 0
      %p328 = por %p326, %p327
      %p329 = scmp.ne.s32.totalorder %s317, %s318
      %p330 = scmp.eq.s32.totalorder %s36, 1
      %p331 = por %p329, %p330
      %p333 = scmp.ne.s32.totalorder %s318, %s332
      %p334 = scmp.eq.s32.totalorder %s36, 0
      %p335 = por %p333, %p334
      %s337 = sadd.s32 %s336, 1
      %p340 = scmp.eq.s32.totalorder %s30, 1
      %p341 = scmp.ne.s32.totalorder %s336, %s338
      %p342 = scmp.eq.s32.totalorder %s30, 0
      %p343 = por %p341, %p342
      %p344 = scmp.ne.s32.totalorder %s336, %s338
      %p345 = scmp.eq.s32.totalorder %s35, 1
      %p346 = por %p344, %p345
      %p347 = scmp.ne.s32.totalorder %s338, %s339
      %p348 = scmp.eq.s32.totalorder %s35, 0
      %p349 = por %p347, %p348
      %p350 = scmp.ne.s32.totalorder %s338, %s339
      %p351 = scmp.eq.s32.totalorder %s36, 1
      %p352 = por %p350, %p351
      %p354 = scmp.ne.s32.totalorder %s339, %s353
      %p355 = scmp.eq.s32.totalorder %s36, 0
      %p356 = por %p354, %p355
      %s358 = sadd.s32 %s357, 1
      %p361 = scmp.eq.s32.totalorder %s30, 1
      %p362 = scmp.ne.s32.totalorder %s357, %s359
      %p363 = scmp.eq.s32.totalorder %s30, 0
      %p364 = por %p362, %p363
      %p365 = scmp.ne.s32.totalorder %s357, %s359
      %p366 = scmp.eq.s32.totalorder %s35, 1
      %p367 = por %p365, %p366
      %p368 = scmp.ne.s32.totalorder %s359, %s360
      %p369 = scmp.eq.s32.totalorder %s35, 0
      %p370 = por %p368, %p369
      %p371 = scmp.ne.s32.totalorder %s359, %s360
      %p372 = scmp.eq.s32.totalorder %s36, 1
      %p373 = por %p371, %p372
      %p375 = scmp.ne.s32.totalorder %s360, %s374
      %p376 = scmp.eq.s32.totalorder %s36, 0
      %p377 = por %p375, %p376
      %s379 = sadd.s32 %s378, 1
      %p382 = scmp.eq.s32.totalorder %s30, 1
      %p383 = scmp.ne.s32.totalorder %s378, %s380
      %p384 = scmp.eq.s32.totalorder %s30, 0
      %p385 = por %p383, %p384
      %p386 = scmp.ne.s32.totalorder %s378, %s380
      %p387 = scmp.eq.s32.totalorder %s35, 1
      %p388 = por %p386, %p387
      %p389 = scmp.ne.s32.totalorder %s380, %s381
      %p390 = scmp.eq.s32.totalorder %s35, 0
      %p391 = por %p389, %p390
      %p392 = scmp.ne.s32.totalorder %s380, %s381
      %p393 = scmp.eq.s32.totalorder %s36, 1
      %p394 = por %p392, %p393
      %p396 = scmp.ne.s32.totalorder %s381, %s395
      %p397 = scmp.eq.s32.totalorder %s36, 0
      %p398 = por %p396, %p397
      %s399 = ssub.s32 %s30, %s37
      %p400 = scmp.eq.s32.totalorder %s399, 0
      %s402 = sadd.s32 %s401, 1
      %s403 = scalar_select %p400, %s401, %s402
      %p406 = pneg %p400
      %p407 = scmp.eq.s32.totalorder %s30, 1
      %p408 = por %p406, %p407
      %p409 = scmp.ne.s32.totalorder %s401, %s404
      %p410 = scmp.eq.s32.totalorder %s30, 0
      %p411 = por %p409, %p410
      %p412 = scmp.ne.s32.totalorder %s401, %s404
      %p413 = scmp.eq.s32.totalorder %s35, 1
      %p414 = por %p412, %p413
      %p415 = scmp.ne.s32.totalorder %s404, %s405
      %p416 = scmp.eq.s32.totalorder %s35, 0
      %p417 = por %p415, %p416
      %p418 = scmp.ne.s32.totalorder %s404, %s405
      %p419 = scmp.eq.s32.totalorder %s36, 1
      %p420 = por %p418, %p419
      %p422 = scmp.ne.s32.totalorder %s405, %s421
      %p423 = scmp.eq.s32.totalorder %s36, 0
      %p424 = por %p422, %p423
      %s425 = ssub.s32 %s30, %s37
      %p426 = scmp.eq.s32.totalorder %s425, 0
      %s428 = sadd.s32 %s427, 1
      %s429 = scalar_select %p426, %s427, %s428
      %p432 = pneg %p426
      %p433 = scmp.eq.s32.totalorder %s30, 1
      %p434 = por %p432, %p433
      %p435 = scmp.ne.s32.totalorder %s427, %s430
      %p436 = scmp.eq.s32.totalorder %s30, 0
      %p437 = por %p435, %p436
      %p438 = scmp.ne.s32.totalorder %s427, %s430
      %p439 = scmp.eq.s32.totalorder %s35, 1
      %p440 = por %p438, %p439
      %p441 = scmp.ne.s32.totalorder %s430, %s431
      %p442 = scmp.eq.s32.totalorder %s35, 0
      %p443 = por %p441, %p442
      %p444 = scmp.ne.s32.totalorder %s430, %s431
      %p445 = scmp.eq.s32.totalorder %s36, 1
      %p446 = por %p444, %p445
      %p448 = scmp.ne.s32.totalorder %s431, %s447
      %p449 = scmp.eq.s32.totalorder %s36, 0
      %p450 = por %p448, %p449
      %p451 = scmp.le.s32.totalorder 1, %s30
      %p452 = scmp.lt.s32.totalorder %s30, 3
      %p453 = pnand %p451, %p452
      %p454 = pneg %p453
      // Predicated region
      $region9: #{tpu_custom_call.1} parent=5 // pred_check
        _
      $region10: #{tpu_custom_call.1} parent=5 // pred_check_branch
        %456 = sbr.rel (%p453) target = $region12
      $region11: #{tpu_custom_call.1} parent=5 // pred_region
        %s457 = ssub.s32 %s30, 1
        // Predicated region
        $region13: #{tpu_custom_call.1} parent=11 // pred_check
          %p458 = pneg %p181
        $region14: #{tpu_custom_call.1} parent=11 // pred_check_branch
          %460 = sbr.rel (%p458) target = $region16
        $region15: #{tpu_custom_call.1} parent=11 // pred_region
          _
        $region16: #{tpu_custom_call.1} parent=11 // pred_fallthru
          _
        // Predicated region
        $region17: #{tpu_custom_call.1} parent=11 // pred_check
          %p461 = pneg %p202
        $region18: #{tpu_custom_call.1} parent=11 // pred_check_branch
          %463 = sbr.rel (%p461) target = $region20
        $region19: #{tpu_custom_call.1} parent=11 // pred_region
          _
        $region20: #{tpu_custom_call.1} parent=11 // pred_fallthru
          _
        // Predicated region
        $region21: #{tpu_custom_call.1} parent=11 // pred_check
          %p464 = pneg %p223
        $region22: #{tpu_custom_call.1} parent=11 // pred_check_branch
          %466 = sbr.rel (%p464) target = $region24
        $region23: #{tpu_custom_call.1} parent=11 // pred_region
          _
        $region24: #{tpu_custom_call.1} parent=11 // pred_fallthru
          _
        // Predicated region
        $region25: #{tpu_custom_call.1} parent=11 // pred_check
          %p467 = pneg %p244
        $region26: #{tpu_custom_call.1} parent=11 // pred_check_branch
          %469 = sbr.rel (%p467) target = $region28
        $region27: #{tpu_custom_call.1} parent=11 // pred_region
          _
        $region28: #{tpu_custom_call.1} parent=11 // pred_fallthru
          _
        // Predicated region
        $region29: #{tpu_custom_call.1} parent=11 // pred_check
          %p470 = pneg %p265
        $region30: #{tpu_custom_call.1} parent=11 // pred_check_branch
          %472 = sbr.rel (%p470) target = $region32
        $region31: #{tpu_custom_call.1} parent=11 // pred_region
          _
        $region32: #{tpu_custom_call.1} parent=11 // pred_fallthru
          _
        // Predicated region
        $region33: #{tpu_custom_call.1} parent=11 // pred_check
          %p473 = pneg %p286
        $region34: #{tpu_custom_call.1} parent=11 // pred_check_branch
          %475 = sbr.rel (%p473) target = $region36
        $region35: #{tpu_custom_call.1} parent=11 // pred_region
          _
        $region36: #{tpu_custom_call.1} parent=11 // pred_fallthru
          _
        // Predicated region
        $region37: #{tpu_custom_call.1} parent=11 // pred_check
          %p476 = pneg %p307
        $region38: #{tpu_custom_call.1} parent=11 // pred_check_branch
          %478 = sbr.rel (%p476) target = $region40
        $region39: #{tpu_custom_call.1} parent=11 // pred_region
          _
        $region40: #{tpu_custom_call.1} parent=11 // pred_fallthru
          _
        // Predicated region
        $region41: #{tpu_custom_call.1} parent=11 // pred_check
          %p479 = pneg %p328
        $region42: #{tpu_custom_call.1} parent=11 // pred_check_branch
          %481 = sbr.rel (%p479) target = $region44
        $region43: #{tpu_custom_call.1} parent=11 // pred_region
          _
        $region44: #{tpu_custom_call.1} parent=11 // pred_fallthru
          _
        // Predicated region
        $region45: #{tpu_custom_call.1} parent=11 // pred_check
          %p482 = pneg %p349
        $region46: #{tpu_custom_call.1} parent=11 // pred_check_branch
          %484 = sbr.rel (%p482) target = $region48
        $region47: #{tpu_custom_call.1} parent=11 // pred_region
          _
        $region48: #{tpu_custom_call.1} parent=11 // pred_fallthru
          _
        // Predicated region
        $region49: #{tpu_custom_call.1} parent=11 // pred_check
          %p485 = pneg %p370
        $region50: #{tpu_custom_call.1} parent=11 // pred_check_branch
          %487 = sbr.rel (%p485) target = $region52
        $region51: #{tpu_custom_call.1} parent=11 // pred_region
          _
        $region52: #{tpu_custom_call.1} parent=11 // pred_fallthru
          _
        // Predicated region
        $region53: #{tpu_custom_call.1} parent=11 // pred_check
          %p488 = pneg %p391
        $region54: #{tpu_custom_call.1} parent=11 // pred_check_branch
          %490 = sbr.rel (%p488) target = $region56
        $region55: #{tpu_custom_call.1} parent=11 // pred_region
          _
        $region56: #{tpu_custom_call.1} parent=11 // pred_fallthru
          _
      $region12: #{tpu_custom_call.1} parent=5 // pred_fallthru
        _
      %p491 = scmp.lt.s32.totalorder %s30, 2
      // Predicated region
      $region57: #{tpu_custom_call.1} parent=5 // pred_check
        %p492 = pneg %p491
      $region58: #{tpu_custom_call.1} parent=5 // pred_check_branch
        %494 = sbr.rel (%p492) target = $region60
      $region59: #{tpu_custom_call.1} parent=5 // pred_region
        // Predicated region
        $region61: #{tpu_custom_call.1} parent=59 // pred_check
          %p495 = pneg %p50
        $region62: #{tpu_custom_call.1} parent=59 // pred_check_branch
          %497 = sbr.rel (%p495) target = $region64
        $region63: #{tpu_custom_call.1} parent=59 // pred_region
          %p498 = scmp.lt.s32.totalorder %s30, 1
          %s499 = scalar_select %p498, %s30, 1
          %s500 = smul.addr %s499, 4
          %s501 = smul.addr %s500, 4
          %s502 = scalar_lea.vmem %s0, %s501
        $region64: #{tpu_custom_call.1} parent=59 // pred_fallthru
          _
        // Predicated region
        $region65: #{tpu_custom_call.1} parent=59 // pred_check
          %p503 = pneg %p76
        $region66: #{tpu_custom_call.1} parent=59 // pred_check_branch
          %505 = sbr.rel (%p503) target = $region68
        $region67: #{tpu_custom_call.1} parent=59 // pred_region
          %p506 = scmp.lt.s32.totalorder %s30, 1
          %s507 = scalar_select %p506, %s30, 1
          %s508 = smul.addr %s507, 3
          %s509 = smul.addr %s508, 4
          %s510 = scalar_lea.vmem %s1, %s509
        $region68: #{tpu_custom_call.1} parent=59 // pred_fallthru
          _
        // Predicated region
        $region69: #{tpu_custom_call.1} parent=59 // pred_check
          %p511 = pneg %p102
        $region70: #{tpu_custom_call.1} parent=59 // pred_check_branch
          %513 = sbr.rel (%p511) target = $region72
        $region71: #{tpu_custom_call.1} parent=59 // pred_region
          %p514 = scmp.lt.s32.totalorder %s30, 1
          %s515 = scalar_select %p514, %s30, 1
          %s516 = smul.addr %s515, 4
          %s517 = scalar_lea.vmem %s2, %s516
        $region72: #{tpu_custom_call.1} parent=59 // pred_fallthru
          _
        // Predicated region
        $region73: #{tpu_custom_call.1} parent=59 // pred_check
          %p518 = pneg %p128
        $region74: #{tpu_custom_call.1} parent=59 // pred_check_branch
          %520 = sbr.rel (%p518) target = $region76
        $region75: #{tpu_custom_call.1} parent=59 // pred_region
          %p521 = scmp.lt.s32.totalorder %s30, 1
          %s522 = scalar_select %p521, %s30, 1
          %s523 = scalar_lea.vmem %s3, %s522
        $region76: #{tpu_custom_call.1} parent=59 // pred_fallthru
          _
        // Predicated region
        $region77: #{tpu_custom_call.1} parent=59 // pred_check
          %p524 = pneg %p154
        $region78: #{tpu_custom_call.1} parent=59 // pred_check_branch
          %526 = sbr.rel (%p524) target = $region80
        $region79: #{tpu_custom_call.1} parent=59 // pred_region
          %p527 = scmp.lt.s32.totalorder %s30, 1
          %s528 = scalar_select %p527, %s30, 1
          %s529 = smul.addr %s528, 8
          %s530 = scalar_lea.vmem %s4, %s529
        $region80: #{tpu_custom_call.1} parent=59 // pred_fallthru
          _
      $region60: #{tpu_custom_call.1} parent=5 // pred_fallthru
        _
      %p531 = scmp.le.s32.totalorder 1, %s30
      %p532 = scmp.lt.s32.totalorder %s30, 3
      %p533 = pnand %p531, %p532
      %p534 = pneg %p533
      // Predicated region
      $region81: #{tpu_custom_call.1} parent=5 // pred_check
        _
      $region82: #{tpu_custom_call.1} parent=5 // pred_check_branch
        %536 = sbr.rel (%p533) target = $region84
      $region83: #{tpu_custom_call.1} parent=5 // pred_region
        %s537 = ssub.s32 %s30, 1
        %p538 = scmp.lt.s32.totalorder %s35, 1
        %s539 = scalar_select %p538, %s35, 1
        %s540 = smul.addr %s539, 4
        %s541 = smul.addr %s540, 4
        %s542 = scalar_lea.vmem %s0, %s541
        %p543 = pneg %p56
        %p544 = pneg %p53
        %p545 = scmp.lt.s32.totalorder %s35, 1
        %s546 = scalar_select %p545, %s35, 1
        %s547 = smul.addr %s546, 3
        %s548 = smul.addr %s547, 4
        %s549 = scalar_lea.vmem %s1, %s548
        %p550 = pneg %p82
        %p551 = pneg %p79
        %p552 = scmp.lt.s32.totalorder %s35, 1
        %s553 = scalar_select %p552, %s35, 1
        %s554 = smul.addr %s553, 4
        %s555 = scalar_lea.vmem %s2, %s554
        %p556 = pneg %p108
        %p557 = pneg %p105
        %p558 = scmp.lt.s32.totalorder %s35, 1
        %s559 = scalar_select %p558, %s35, 1
        %s560 = scalar_lea.vmem %s3, %s559
        %p561 = pneg %p134
        %p562 = pneg %p131
        %p563 = scmp.lt.s32.totalorder %s35, 1
        %s564 = scalar_select %p563, %s35, 1
        %s565 = smul.addr %s564, 8
        %s566 = scalar_lea.vmem %s4, %s565
        %p567 = pneg %p160
        %p568 = pneg %p157
        %p569 = pneg %p181
        %p570 = pneg %p178
        %p571 = pneg %p202
        %p572 = pneg %p199
        %p573 = pneg %p223
        %p574 = pneg %p220
        %p575 = pneg %p244
        %p576 = pneg %p241
        %p577 = pneg %p265
        %p578 = pneg %p262
        %p579 = pneg %p286
        %p580 = pneg %p283
        %p581 = pneg %p307
        %p582 = pneg %p304
        %p583 = pneg %p328
        %p584 = pneg %p325
        %p585 = pneg %p349
        %p586 = pneg %p346
        %p587 = pneg %p370
        %p588 = pneg %p367
        %p589 = pneg %p391
        %p590 = pneg %p388
        %p591 = pneg %p417
        %p592 = pneg %p414
        %s593 = sand.u32 %s404, 1
        %s594 = scalar_lea.sflag [#allocation4], %s593
        %s595 = sand.u32 %s404, 1
        %s596 = smul.addr %s595, 16
        %s597 = scalar_lea.vmem [#allocation3], %s596
        %p598 = pneg %p443
        %p599 = pneg %p440
        %s600 = sand.u32 %s430, 1
        %s601 = scalar_lea.sflag [#allocation6], %s600
        %s602 = sand.u32 %s430, 1
        %s603 = smul.addr %s602, 8
        %s604 = scalar_lea.vmem [#allocation5], %s603
        %p605 = scmp.lt.s32.totalorder %s35, 1
        %s606 = scalar_select %p605, %s35, 1
        %s607 = smul.addr %s606, 4
        %s608 = smul.addr %s607, 4
        %s609 = scalar_lea.vmem %s0, %s608
        %p610 = scmp.lt.s32.totalorder %s35, 1
        %s611 = scalar_select %p610, %s35, 1
        %s612 = smul.addr %s611, 3
        %s613 = smul.addr %s612, 4
        %s614 = scalar_lea.vmem %s1, %s613
        %p615 = scmp.lt.s32.totalorder %s35, 1
        %s616 = scalar_select %p615, %s35, 1
        %s617 = smul.addr %s616, 4
        %s618 = scalar_lea.vmem %s2, %s617
        %p619 = scmp.lt.s32.totalorder %s35, 1
        %s620 = scalar_select %p619, %s35, 1
        %s621 = scalar_lea.vmem %s3, %s620
        %p622 = scmp.lt.s32.totalorder %s35, 1
        %s623 = scalar_select %p622, %s35, 1
        %s624 = smul.addr %s623, 8
        %s625 = scalar_lea.vmem %s4, %s624
        %v627 = vld [vmem:[%s609] sm:$0xf]
        %v628 = vld [vmem:[%s609 + $0x4] sm:$0xf]
        %v629 = vld [vmem:[%s609 + $0x8] sm:$0xf]
        %v630 = vld [vmem:[%s609 + $0xc] sm:$0xf]
        %v631 = vld [vmem:[%s614] sm:$0xf]
        %v632 = vld [vmem:[%s614 + $0x4] sm:$0xf]
        %v633 = vld [vmem:[%s614 + $0x8] sm:$0xf]
        %v634 = vld [vmem:[%s618] sm:$0xf]
        %v635 = vld [vmem:[%s621] sm:$0x1]
        %v636 = vld [vmem:[%s625] sm:$0xff]
        %v637 = vld [vmem:[%s5] sm:$0xf]
        %v638 = vld [vmem:[%s5 + $0x4] sm:$0xf]
        %v639 = vld [vmem:[%s5 + $0x8] sm:$0xf]
        %v640 = vld [vmem:[%s5 + $0xc] sm:$0xf]
        %v641 = vld [vmem:[%s5 + $0x10] sm:$0xf]
        %v642 = vld [vmem:[%s5 + $0x14] sm:$0xf]
        %v643 = vld [vmem:[%s5 + $0x18] sm:$0xf]
        %v644 = vld [vmem:[%s5 + $0x1c] sm:$0xf]
        %v645 = vld [vmem:[%s6] sm:$0xff]
        %v646 = vld [vmem:[%s6 + $0x8] sm:$0xff]
        %v647 = vld [vmem:[%s6 + $0x10] sm:$0xff]
        %v648 = vld [vmem:[%s6 + $0x18] sm:$0xff]
        %v649 = vld [vmem:[%s6 + $0x20] sm:$0xff]
        %v650 = vld [vmem:[%s6 + $0x28] sm:$0xff]
        %v651 = vld [vmem:[%s6 + $0x30] sm:$0xff]
        %v652 = vld [vmem:[%s6 + $0x38] sm:$0xff]
        %654 = vset.pattern.permute.xlu0 0
        %655 = vperm.xlu0 %654, %v645
        %v656 = vpop.permute.xlu0 %655
        %659 = vset.pattern.permute.xlu0 0
        %660 = vperm.xlu0 %659, %v646
        %v661 = vpop.permute.xlu0 %660
        %664 = vset.pattern.permute.xlu0 0
        %665 = vperm.xlu0 %664, %v647
        %v666 = vpop.permute.xlu0 %665
        %669 = vset.pattern.permute.xlu0 0
        %670 = vperm.xlu0 %669, %v648
        %v671 = vpop.permute.xlu0 %670
        %674 = vset.pattern.permute.xlu0 0
        %675 = vperm.xlu0 %674, %v649
        %v676 = vpop.permute.xlu0 %675
        %679 = vset.pattern.permute.xlu0 0
        %680 = vperm.xlu0 %679, %v650
        %v681 = vpop.permute.xlu0 %680
        %684 = vset.pattern.permute.xlu0 0
        %685 = vperm.xlu0 %684, %v651
        %v686 = vpop.permute.xlu0 %685
        %689 = vset.pattern.permute.xlu0 0
        %690 = vperm.xlu0 %689, %v652
        %v691 = vpop.permute.xlu0 %690
        %v701 = vunpack.c.l.b16 %v637
        %v702 = vunpack.c.l.b16 %v638
        %v703 = vunpack.c.l.b16 %v639
        %v704 = vunpack.c.l.b16 %v640
        %v705 = vunpack.c.l.b16 %v641
        %v706 = vunpack.c.l.b16 %v642
        %v707 = vunpack.c.l.b16 %v643
        %v708 = vunpack.c.l.b16 %v644
        %v709 = vpack.c.b16 %v702, %v701
        %v710 = vpack.c.b16 %v704, %v703
        %v711 = vpack.c.b16 %v706, %v705
        %v712 = vpack.c.b16 %v708, %v707
        %v717 = vunpack.c.l.b16 %v627
        %v718 = vunpack.c.l.b16 %v628
        %v719 = vunpack.c.l.b16 %v629
        %v720 = vunpack.c.l.b16 %v630
        %v721 = vpack.c.b16 %v718, %v717
        %v722 = vpack.c.b16 %v720, %v719
        %vm725 = vcmask 261120
        %v727 = vsel %vm725, %v709, 0
        %v730 = vsel %vm725, %v710, 0
        %v733 = vsel %vm725, %v711, 0
        %v736 = vsel %vm725, %v712, 0
        %738 = vmatprep.subr.bf16.mxu0 0
        %739 = vmatpush1.bf16.msra.mxu0 0
        %740 = vmatprep.subr.bf16.mxu0 0
        %741 = vmatpush1.bf16.msra.mxu0 0
        %742 = vmatprep.subr.bf16.mxu0 0
        %743 = vmatpush1.bf16.msra.mxu0 0
        %744 = vmatprep.subr.bf16.mxu0 0
        %745 = vmatpush1.bf16.msra.mxu0 0
        %746 = vmatprep.subr.bf16.mxu0 0
        %747 = vmatpush1.bf16.msra.mxu0 0
        %748 = vmatprep.subr.bf16.mxu0 0
        %749 = vmatpush1.bf16.msra.mxu0 0
        %750 = vmatprep.subr.bf16.mxu0 0
        %751 = vmatpush1.bf16.msra.mxu0 %v722
        %752 = vmatprep.subr.bf16.mxu0 0
        %753 = vmatpush1.bf16.msra.mxu0 %v721
        %754 = vmatprep.subr.bf16.mxu0 0
        %755 = vmatpush2.bf16.msra.mxu0 0
        %756 = vmatprep.subr.bf16.mxu0 0
        %757 = vmatpush2.bf16.msra.mxu0 0
        %758 = vmatprep.subr.bf16.mxu0 0
        %759 = vmatpush2.bf16.msra.mxu0 0
        %760 = vmatprep.subr.bf16.mxu0 0
        %761 = vmatpush2.bf16.msra.mxu0 0
        %762 = vmatprep.subr.bf16.mxu0 0
        %763 = vmatpush2.bf16.msra.mxu0 0
        %764 = vmatprep.subr.bf16.mxu0 0
        %765 = vmatpush2.bf16.msra.mxu0 0
        %766 = vmatprep.subr.bf16.mxu0 0
        %767 = vmatpush2.bf16.msra.mxu0 0
        %768 = vmatprep.subr.bf16.mxu0 0
        %769 = vmatpush2.bf16.msra.mxu0 0
        %770 = vmatprep.mubr.bf16.mxu0 0
        %771 = vmatmul.mubr.bf16.gmra.mxu0 %v727
        %v772 = vpop.f32.mrf.mxu0
        %v773 = vadd.f32 %v656, %v772
        %v774 = vpop.f32.mrf.mxu0
        %v775 = vpop.f32.mrf.mxu0
        %v776 = vadd.f32 %v661, %v775
        %v777 = vpop.f32.mrf.mxu0
        %778 = vmatprep.mubr.bf16.mxu0 0
        %779 = vmatmul.mubr.bf16.gmra.mxu0 %v730
        %v780 = vpop.f32.mrf.mxu0
        %v781 = vadd.f32 %v666, %v780
        %v782 = vpop.f32.mrf.mxu0
        %v783 = vpop.f32.mrf.mxu0
        %v784 = vadd.f32 %v671, %v783
        %v785 = vpop.f32.mrf.mxu0
        %786 = vmatprep.mubr.bf16.mxu0 0
        %787 = vmatmul.mubr.bf16.gmra.mxu0 %v733
        %v788 = vpop.f32.mrf.mxu0
        %v789 = vadd.f32 %v676, %v788
        %v790 = vpop.f32.mrf.mxu0
        %v791 = vpop.f32.mrf.mxu0
        %v792 = vadd.f32 %v681, %v791
        %v793 = vpop.f32.mrf.mxu0
        %794 = vmatprep.mubr.bf16.mxu0 0
        %795 = vmatmul.mubr.bf16.gmra.mxu0 %v736
        %v796 = vpop.f32.mrf.mxu0
        %v797 = vadd.f32 %v686, %v796
        %v798 = vpop.f32.mrf.mxu0
        %v799 = vpop.f32.mrf.mxu0
        %v800 = vadd.f32 %v691, %v799
        %v801 = vpop.f32.mrf.mxu0
        %802 = vdwg.mxu0
        %v803 = vmax.f32 %v773, 0.0
        %v804 = vmax.f32 %v776, 0.0
        %v805 = vmax.f32 %v781, 0.0
        %v806 = vmax.f32 %v784, 0.0
        %vm807 = vcmask 523264
        %v808 = vsel %vm807, %v789, 0.0
        %809 = vadd.xlane.f32.xlu0 %v808
        %v810 = vpop.xlane.xlu0 %809
        %v811 = vsel %vm807, %v792, 0.0
        %812 = vadd.xlane.f32.xlu0 %v811
        %v813 = vpop.xlane.xlu0 %812
        %v814 = vsel %vm807, %v797, 0.0
        %815 = vadd.xlane.f32.xlu0 %v814
        %v816 = vpop.xlane.xlu0 %815
        %v817 = vsel %vm807, %v800, 0.0
        %818 = vadd.xlane.f32.xlu0 %v817
        %v819 = vpop.xlane.xlu0 %818
        %v820 = vrcp.pop 64.0
        %v821 = vmul.f32 %v810, %v820
        %v822 = vmul.f32 %v813, %v820
        %v823 = vmul.f32 %v816, %v820
        %v824 = vmul.f32 %v819, %v820
        %v825 = vsub.f32 %v789, %v821
        %v826 = vsub.f32 %v792, %v822
        %v827 = vsub.f32 %v797, %v823
        %v828 = vsub.f32 %v800, %v824
        %v829 = vmul.f32 %v825, %v825
        %v830 = vmul.f32 %v826, %v826
        %v831 = vmul.f32 %v827, %v827
        %v832 = vmul.f32 %v828, %v828
        %v833 = vsel %vm807, %v829, 0.0
        %834 = vadd.xlane.f32.xlu0 %v833
        %v835 = vpop.xlane.xlu0 %834
        %v836 = vsel %vm807, %v830, 0.0
        %837 = vadd.xlane.f32.xlu0 %v836
        %v838 = vpop.xlane.xlu0 %837
        %v839 = vsel %vm807, %v831, 0.0
        %840 = vadd.xlane.f32.xlu0 %v839
        %v841 = vpop.xlane.xlu0 %840
        %v842 = vsel %vm807, %v832, 0.0
        %843 = vadd.xlane.f32.xlu0 %v842
        %v844 = vpop.xlane.xlu0 %843
        %v845 = vmul.f32 %v835, %v820
        %v846 = vmul.f32 %v838, %v820
        %v847 = vmul.f32 %v841, %v820
        %v848 = vmul.f32 %v844, %v820
        %v849 = vadd.f32 %v845, 1e-05
        %v850 = vadd.f32 %v846, 1e-05
        %v851 = vadd.f32 %v847, 1e-05
        %v852 = vadd.f32 %v848, 1e-05
        %v853 = vrsqrt.pop %v849
        %v854 = vrsqrt.pop %v850
        %v855 = vrsqrt.pop %v851
        %v856 = vrsqrt.pop %v852
        %v857 = vmul.f32 %v825, %v853
        %v858 = vmul.f32 %v826, %v854
        %v859 = vmul.f32 %v827, %v855
        %v860 = vmul.f32 %v828, %v856
        %v861 = vld [vmem:[%s7] sm:$0xf]
        %v862 = vld [vmem:[%s7 + $0x4] sm:$0xf]
        %v863 = vld [vmem:[%s7 + $0x8] sm:$0xf]
        %v864 = vld [vmem:[%s7 + $0xc] sm:$0xf]
        %v865 = vld [vmem:[%s8] sm:$0xff]
        %v866 = vld [vmem:[%s8 + $0x8] sm:$0xff]
        %v867 = vld [vmem:[%s8 + $0x10] sm:$0xff]
        %v868 = vld [vmem:[%s8 + $0x18] sm:$0xff]
        %870 = vset.pattern.permute.xlu0 0
        %871 = vperm.xlu0 %870, %v865
        %v872 = vpop.permute.xlu0 %871
        %875 = vset.pattern.permute.xlu0 0
        %876 = vperm.xlu0 %875, %v866
        %v877 = vpop.permute.xlu0 %876
        %880 = vset.pattern.permute.xlu0 0
        %881 = vperm.xlu0 %880, %v867
        %v882 = vpop.permute.xlu0 %881
        %885 = vset.pattern.permute.xlu0 0
        %886 = vperm.xlu0 %885, %v868
        %v887 = vpop.permute.xlu0 %886
        %v893 = vunpack.c.l.b16 %v861
        %v894 = vunpack.c.l.b16 %v862
        %v895 = vunpack.c.l.b16 %v863
        %v896 = vunpack.c.l.b16 %v864
        %v897 = vpack.c.b16 %v894, %v893
        %v898 = vpack.c.b16 %v896, %v895
        %v902 = vunpack.c.l.b16 %v631
        %v903 = vunpack.c.l.b16 %v632
        %v904 = vunpack.c.l.b16 %v633
        %v905 = vpack.c.b16 %v903, %v902
        %v906 = vpack.c.b16 %v904, %v904
        %vm908 = vcmask 195584
        %v910 = vsel %vm908, %v897, 0
        %v913 = vsel %vm908, %v898, 0
        %vm915 = vcmask 1043456
        %v917 = vsel %vm915, %v906, 0
        %919 = vmatprep.subr.bf16.mxu0 0
        %920 = vmatpush1.bf16.msra.mxu0 0
        %921 = vmatprep.subr.bf16.mxu0 0
        %922 = vmatpush1.bf16.msra.mxu0 0
        %923 = vmatprep.subr.bf16.mxu0 0
        %924 = vmatpush1.bf16.msra.mxu0 0
        %925 = vmatprep.subr.bf16.mxu0 0
        %926 = vmatpush1.bf16.msra.mxu0 0
        %927 = vmatprep.subr.bf16.mxu0 0
        %928 = vmatpush1.bf16.msra.mxu0 0
        %929 = vmatprep.subr.bf16.mxu0 0
        %930 = vmatpush1.bf16.msra.mxu0 0
        %931 = vmatprep.subr.bf16.mxu0 0
        %932 = vmatpush1.bf16.msra.mxu0 %v917
        %933 = vmatprep.subr.bf16.mxu0 0
        %934 = vmatpush1.bf16.msra.mxu0 %v905
        %935 = vmatprep.subr.bf16.mxu0 0
        %936 = vmatpush2.bf16.msra.mxu0 0
        %937 = vmatprep.subr.bf16.mxu0 0
        %938 = vmatpush2.bf16.msra.mxu0 0
        %939 = vmatprep.subr.bf16.mxu0 0
        %940 = vmatpush2.bf16.msra.mxu0 0
        %941 = vmatprep.subr.bf16.mxu0 0
        %942 = vmatpush2.bf16.msra.mxu0 0
        %943 = vmatprep.subr.bf16.mxu0 0
        %944 = vmatpush2.bf16.msra.mxu0 0
        %945 = vmatprep.subr.bf16.mxu0 0
        %946 = vmatpush2.bf16.msra.mxu0 0
        %947 = vmatprep.subr.bf16.mxu0 0
        %948 = vmatpush2.bf16.msra.mxu0 0
        %949 = vmatprep.subr.bf16.mxu0 0
        %950 = vmatpush2.bf16.msra.mxu0 0
        %951 = vmatprep.mubr.bf16.mxu0 0
        %952 = vmatmul.mubr.bf16.gmra.mxu0 %v910
        %v953 = vpop.f32.mrf.mxu0
        %v954 = vadd.f32 %v872, %v953
        %v955 = vpop.f32.mrf.mxu0
        %v956 = vpop.f32.mrf.mxu0
        %v957 = vadd.f32 %v877, %v956
        %v958 = vpop.f32.mrf.mxu0
        %959 = vmatprep.mubr.bf16.mxu0 0
        %960 = vmatmul.mubr.bf16.gmra.mxu0 %v913
        %v961 = vpop.f32.mrf.mxu0
        %v962 = vadd.f32 %v882, %v961
        %v963 = vpop.f32.mrf.mxu0
        %v964 = vpop.f32.mrf.mxu0
        %v965 = vadd.f32 %v887, %v964
        %v966 = vpop.f32.mrf.mxu0
        %967 = vdwg.mxu0
        %v969 = vlaneseq
        %v970 = vshrl.u32 %v969, 7
        %v971 = vsub.s32 0, %v970
        %v972 = vrot.slane %v635, %v971
        %v974 = vmul.f32 %v954, %v972
        %v975 = vmul.f32 %v957, %v972
        %v976 = vmul.f32 %v962, %v972
        %v977 = vmul.f32 %v965, %v972
        %v978 = vld [vmem:[%s9] sm:$0xf]
        %v979 = vld [vmem:[%s9 + $0x4] sm:$0xf]
        %v980 = vld [vmem:[%s9 + $0x8] sm:$0xf]
        %v981 = vld [vmem:[%s10] sm:$0x1]
        %v983 = vlaneseq
        %v984 = vshrl.u32 %v983, 7
        %v985 = vsub.s32 0, %v984
        %v986 = vrot.slane %v981, %v985
        %v991 = vunpack.c.l.b16 %v978
        %v992 = vunpack.c.l.b16 %v979
        %v993 = vunpack.c.l.b16 %v980
        %v994 = vpack.c.b16 %v992, %v991
        %v995 = vpack.c.b16 %v993, %v993
        %v998 = vsel %vm908, %v634, 0
        %v1001 = vsel %vm915, %v995, 0
        %1003 = vmatprep.subr.bf16.mxu0 0
        %1004 = vmatpush1.bf16.msra.mxu0 0
        %1005 = vmatprep.subr.bf16.mxu0 0
        %1006 = vmatpush1.bf16.msra.mxu0 0
        %1007 = vmatprep.subr.bf16.mxu0 0
        %1008 = vmatpush1.bf16.msra.mxu0 0
        %1009 = vmatprep.subr.bf16.mxu0 0
        %1010 = vmatpush1.bf16.msra.mxu0 0
        %1011 = vmatprep.subr.bf16.mxu0 0
        %1012 = vmatpush1.bf16.msra.mxu0 0
        %1013 = vmatprep.subr.bf16.mxu0 0
        %1014 = vmatpush1.bf16.msra.mxu0 0
        %1015 = vmatprep.subr.bf16.mxu0 0
        %1016 = vmatpush1.bf16.msra.mxu0 %v1001
        %1017 = vmatprep.subr.bf16.mxu0 0
        %1018 = vmatpush1.bf16.msra.mxu0 %v994
        %1019 = vmatprep.subr.bf16.mxu0 0
        %1020 = vmatpush2.bf16.msra.mxu0 0
        %1021 = vmatprep.subr.bf16.mxu0 0
        %1022 = vmatpush2.bf16.msra.mxu0 0
        %1023 = vmatprep.subr.bf16.mxu0 0
        %1024 = vmatpush2.bf16.msra.mxu0 0
        %1025 = vmatprep.subr.bf16.mxu0 0
        %1026 = vmatpush2.bf16.msra.mxu0 0
        %1027 = vmatprep.subr.bf16.mxu0 0
        %1028 = vmatpush2.bf16.msra.mxu0 0
        %1029 = vmatprep.subr.bf16.mxu0 0
        %1030 = vmatpush2.bf16.msra.mxu0 0
        %1031 = vmatprep.subr.bf16.mxu0 0
        %1032 = vmatpush2.bf16.msra.mxu0 0
        %1033 = vmatprep.subr.bf16.mxu0 0
        %1034 = vmatpush2.bf16.msra.mxu0 0
        %1035 = vmatprep.mubr.bf16.mxu0 0
        %1036 = vmatmul.mubr.bf16.gmra.mxu0 %v998
        %v1037 = vpop.f32.mrf.mxu0
        %v1038 = vadd.f32 %v986, %v1037
        %v1039 = vpop.f32.mrf.mxu0
        %v1040 = vpop.f32.mrf.mxu0
        %v1041 = vpop.f32.mrf.mxu0
        %1042 = vdwg.mxu0
        %1044 = vset.pattern.permute.xlu0 0
        %1045 = vperm.xlu0 %1044, %v636
        %v1046 = vpop.permute.xlu0 %1045
        %v1048 = vmul.f32 %v1038, %v1046
        %v1049 = vmul.f32 %v636, 10000.0
        %v1050 = vsub.f32 %v1049, 10000.0
        %vm1051 = vcmask 130048
        %v1053 = vsel %vm1051, %v1048, 0
        %1055 = vmatprep.subr.mxu0 0.0
        %1056 = vmatpush1.msra.mxu0 0.0
        %1057 = vmatprep.subr.mxu0 0.0
        %1058 = vmatpush1.msra.mxu0 0.0
        %1059 = vmatprep.subr.mxu0 0.0
        %1060 = vmatpush1.msra.mxu0 0.0
        %1061 = vmatprep.subr.mxu0 0.0
        %1062 = vmatpush1.msra.mxu0 0.0
        %1063 = vmatprep.subr.mxu0 0.0
        %1064 = vmatpush1.msra.mxu0 0.0
        %1065 = vmatprep.subr.mxu0 0.0
        %1066 = vmatpush1.msra.mxu0 0.0
        %1067 = vmatprep.subr.mxu0 0.0
        %1068 = vmatpush1.msra.mxu0 0.0
        %1069 = vmatprep.subr.mxu0 0.0
        %1070 = vmatpush1.msra.mxu0 0.0
        %1071 = vmatprep.subr.mxu0 0.0
        %1072 = vmatpush1.msra.mxu0 0.0
        %1073 = vmatprep.subr.mxu0 0.0
        %1074 = vmatpush1.msra.mxu0 0.0
        %1075 = vmatprep.subr.mxu0 0.0
        %1076 = vmatpush1.msra.mxu0 0.0
        %1077 = vmatprep.subr.mxu0 0.0
        %1078 = vmatpush1.msra.mxu0 0.0
        %1079 = vmatprep.subr.mxu0 0.0
        %1080 = vmatpush1.msra.mxu0 0.0
        %1081 = vmatprep.subr.mxu0 0.0
        %1082 = vmatpush1.msra.mxu0 0.0
        %1083 = vmatprep.subr.mxu0 0.0
        %1084 = vmatpush1.msra.mxu0 %v858
        %1085 = vmatprep.subr.mxu0 0.0
        %1086 = vmatpush1.msra.mxu0 %v857
        %1087 = vmatprep.subr.mxu0 0.0
        %1088 = vmatpush2.msra.mxu0 0.0
        %1089 = vmatprep.subr.mxu0 0.0
        %1090 = vmatpush2.msra.mxu0 0.0
        %1091 = vmatprep.subr.mxu0 0.0
        %1092 = vmatpush2.msra.mxu0 0.0
        %1093 = vmatprep.subr.mxu0 0.0
        %1094 = vmatpush2.msra.mxu0 0.0
        %1095 = vmatprep.subr.mxu0 0.0
        %1096 = vmatpush2.msra.mxu0 0.0
        %1097 = vmatprep.subr.mxu0 0.0
        %1098 = vmatpush2.msra.mxu0 0.0
        %1099 = vmatprep.subr.mxu0 0.0
        %1100 = vmatpush2.msra.mxu0 0.0
        %1101 = vmatprep.subr.mxu0 0.0
        %1102 = vmatpush2.msra.mxu0 0.0
        %1103 = vmatprep.subr.mxu0 0.0
        %1104 = vmatpush2.msra.mxu0 0.0
        %1105 = vmatprep.subr.mxu0 0.0
        %1106 = vmatpush2.msra.mxu0 0.0
        %1107 = vmatprep.subr.mxu0 0.0
        %1108 = vmatpush2.msra.mxu0 0.0
        %1109 = vmatprep.subr.mxu0 0.0
        %1110 = vmatpush2.msra.mxu0 0.0
        %1111 = vmatprep.subr.mxu0 0.0
        %1112 = vmatpush2.msra.mxu0 0.0
        %1113 = vmatprep.subr.mxu0 0.0
        %1114 = vmatpush2.msra.mxu0 0.0
        %1115 = vmatprep.subr.mxu0 0.0
        %1116 = vmatpush2.msra.mxu0 0.0
        %1117 = vmatprep.subr.mxu0 0.0
        %1118 = vmatpush2.msra.mxu0 0.0
        %1119 = vmatprep.mubr.f32.mxu0 0.0
        %1120 = vmatmul.mubr.f32.gmra.mxu0 %v1053
        %v1121 = vpop.f32.mrf.mxu0
        %v1122 = vadd.f32 0.0, %v1121
        %v1123 = vpop.f32.mrf.mxu0
        %1124 = vdwg.mxu0
        %v1125 = vmul.f32 %v1122, 0.17677669
        %1127 = vset.pattern.permute.xlu0 0
        %1128 = vperm.xlu0 %1127, %v1050
        %v1129 = vpop.permute.xlu0 %1128
        %v1131 = vadd.f32 %v1125, %v1129
        %v1132 = vsel %vm807, %v1131, -inf
        %v1133 = vrot.slane %v1132, 4
        %v1134 = vmax.f32 %v1132, %v1133
        %v1135 = vrot.slane %v1134, 2
        %v1136 = vmax.f32 %v1134, %v1135
        %v1137 = vrot.slane %v1136, 1
        %v1138 = vmax.f32 %v1136, %v1137
        %v1139 = vsub.f32 %v1131, %v1138
        %v1140 = vmul.f32 %v1139, 1.442695
        %v1141 = vpow.pop %v1140
        %v1142 = vsel %vm807, %v1141, 0.0
        %v1143 = vrot.slane %v1142, 4
        %v1144 = vadd.f32 %v1142, %v1143
        %v1145 = vrot.slane %v1144, 2
        %v1146 = vadd.f32 %v1144, %v1145
        %v1147 = vrot.slane %v1146, 1
        %v1148 = vadd.f32 %v1146, %v1147
        %v1149 = vrcp.pop %v1148
        %v1150 = vmul.f32 %v1141, %v1149
        %v1151 = vsel %vm807, %v1150, 0.0
        %1152 = vadd.xlane.f32.xlu0 %v1151
        %v1153 = vpop.xlane.xlu0 %1152
        %v1154 = vmul.f32 %v1153, 0.015625
        %v1155 = vmul.f32 %v1154, %v1048
        %1157 = vrot.lane.b32.xlu0 %v1155, 96
        %v1158 = vpop.permute.xlu0 %1157
        %1160 = vst.msk [vmem:[%s604] sm:$0xff] %vm1051, %v1158
        %vm1161 = vcmask 64512
        %v1163 = vsel %vm1161, %v974, 0
        %v1166 = vsel %vm1161, %v975, 0
        %1168 = vmatprep.subr.mxu0 0.0
        %1169 = vmatpush1.msra.mxu0 0.0
        %1170 = vmatprep.subr.mxu0 0.0
        %1171 = vmatpush1.msra.mxu0 0.0
        %1172 = vmatprep.subr.mxu0 0.0
        %1173 = vmatpush1.msra.mxu0 0.0
        %1174 = vmatprep.subr.mxu0 0.0
        %1175 = vmatpush1.msra.mxu0 0.0
        %1176 = vmatprep.subr.mxu0 0.0
        %1177 = vmatpush1.msra.mxu0 0.0
        %1178 = vmatprep.subr.mxu0 0.0
        %1179 = vmatpush1.msra.mxu0 0.0
        %1180 = vmatprep.subr.mxu0 0.0
        %1181 = vmatpush1.msra.mxu0 0.0
        %1182 = vmatprep.subr.mxu0 0.0
        %1183 = vmatpush1.msra.mxu0 0.0
        %1184 = vmatprep.subr.mxu0 0.0
        %1185 = vmatpush1.msra.mxu0 0.0
        %1186 = vmatprep.subr.mxu0 0.0
        %1187 = vmatpush1.msra.mxu0 0.0
        %1188 = vmatprep.subr.mxu0 0.0
        %1189 = vmatpush1.msra.mxu0 0.0
        %1190 = vmatprep.subr.mxu0 0.0
        %1191 = vmatpush1.msra.mxu0 0.0
        %1192 = vmatprep.subr.mxu0 0.0
        %1193 = vmatpush1.msra.mxu0 0.0
        %1194 = vmatprep.subr.mxu0 0.0
        %1195 = vmatpush1.msra.mxu0 0.0
        %1196 = vmatprep.subr.mxu0 0.0
        %1197 = vmatpush1.msra.mxu0 0.0
        %1198 = vmatprep.subr.mxu0 0.0
        %1199 = vmatpush1.msra.mxu0 %v1150
        %1200 = vmatprep.subr.mxu0 0.0
        %1201 = vmatpush2.msra.mxu0 0.0
        %1202 = vmatprep.subr.mxu0 0.0
        %1203 = vmatpush2.msra.mxu0 0.0
        %1204 = vmatprep.subr.mxu0 0.0
        %1205 = vmatpush2.msra.mxu0 0.0
        %1206 = vmatprep.subr.mxu0 0.0
        %1207 = vmatpush2.msra.mxu0 0.0
        %1208 = vmatprep.subr.mxu0 0.0
        %1209 = vmatpush2.msra.mxu0 0.0
        %1210 = vmatprep.subr.mxu0 0.0
        %1211 = vmatpush2.msra.mxu0 0.0
        %1212 = vmatprep.subr.mxu0 0.0
        %1213 = vmatpush2.msra.mxu0 0.0
        %1214 = vmatprep.subr.mxu0 0.0
        %1215 = vmatpush2.msra.mxu0 0.0
        %1216 = vmatprep.subr.mxu0 0.0
        %1217 = vmatpush2.msra.mxu0 0.0
        %1218 = vmatprep.subr.mxu0 0.0
        %1219 = vmatpush2.msra.mxu0 0.0
        %1220 = vmatprep.subr.mxu0 0.0
        %1221 = vmatpush2.msra.mxu0 0.0
        %1222 = vmatprep.subr.mxu0 0.0
        %1223 = vmatpush2.msra.mxu0 0.0
        %1224 = vmatprep.subr.mxu0 0.0
        %1225 = vmatpush2.msra.mxu0 0.0
        %1226 = vmatprep.subr.mxu0 0.0
        %1227 = vmatpush2.msra.mxu0 0.0
        %1228 = vmatprep.subr.mxu0 0.0
        %1229 = vmatpush2.msra.mxu0 0.0
        %1230 = vmatprep.subr.mxu0 0.0
        %1231 = vmatpush2.msra.mxu0 0.0
        %1232 = vmatprep.mubr.f32.mxu0 0.0
        %1233 = vmatmul.mubr.f32.gmra.mxu0 %v1163
        %v1234 = vpop.f32.mrf.mxu0
        %v1235 = vadd.f32 0.0, %v1234
        %v1236 = vpop.f32.mrf.mxu0
        %1237 = vmatprep.mubr.f32.mxu0 0.0
        %1238 = vmatmul.mubr.f32.gmra.mxu0 %v1166
        %v1239 = vpop.f32.mrf.mxu0
        %v1240 = vadd.f32 0.0, %v1239
        %v1241 = vpop.f32.mrf.mxu0
        %1242 = vdwg.mxu0
        %1243 = vst.msk [vmem:[#allocation2] sm:$0xff] %vm807, %v1235
        %1244 = vst.msk [vmem:[#allocation2 + $0x8] sm:$0xff] %vm807, %v1240
        %1245 = vrot.lane.b32.xlu0 %v1048, 112
        %v1246 = vpop.permute.xlu0 %1245
        %v1247 = vsel %vm1051, %v1246, 0
        %1249 = vmatprep.subr.mxu0 0.0
        %1250 = vmatpush1.msra.mxu0 0.0
        %1251 = vmatprep.subr.mxu0 0.0
        %1252 = vmatpush1.msra.mxu0 0.0
        %1253 = vmatprep.subr.mxu0 0.0
        %1254 = vmatpush1.msra.mxu0 0.0
        %1255 = vmatprep.subr.mxu0 0.0
        %1256 = vmatpush1.msra.mxu0 0.0
        %1257 = vmatprep.subr.mxu0 0.0
        %1258 = vmatpush1.msra.mxu0 0.0
        %1259 = vmatprep.subr.mxu0 0.0
        %1260 = vmatpush1.msra.mxu0 0.0
        %1261 = vmatprep.subr.mxu0 0.0
        %1262 = vmatpush1.msra.mxu0 0.0
        %1263 = vmatprep.subr.mxu0 0.0
        %1264 = vmatpush1.msra.mxu0 0.0
        %1265 = vmatprep.subr.mxu0 0.0
        %1266 = vmatpush1.msra.mxu0 0.0
        %1267 = vmatprep.subr.mxu0 0.0
        %1268 = vmatpush1.msra.mxu0 0.0
        %1269 = vmatprep.subr.mxu0 0.0
        %1270 = vmatpush1.msra.mxu0 0.0
        %1271 = vmatprep.subr.mxu0 0.0
        %1272 = vmatpush1.msra.mxu0 0.0
        %1273 = vmatprep.subr.mxu0 0.0
        %1274 = vmatpush1.msra.mxu0 0.0
        %1275 = vmatprep.subr.mxu0 0.0
        %1276 = vmatpush1.msra.mxu0 0.0
        %1277 = vmatprep.subr.mxu0 0.0
        %1278 = vmatpush1.msra.mxu0 %v860
        %1279 = vmatprep.subr.mxu0 0.0
        %1280 = vmatpush1.msra.mxu0 %v859
        %1281 = vmatprep.subr.mxu0 0.0
        %1282 = vmatpush2.msra.mxu0 0.0
        %1283 = vmatprep.subr.mxu0 0.0
        %1284 = vmatpush2.msra.mxu0 0.0
        %1285 = vmatprep.subr.mxu0 0.0
        %1286 = vmatpush2.msra.mxu0 0.0
        %1287 = vmatprep.subr.mxu0 0.0
        %1288 = vmatpush2.msra.mxu0 0.0
        %1289 = vmatprep.subr.mxu0 0.0
        %1290 = vmatpush2.msra.mxu0 0.0
        %1291 = vmatprep.subr.mxu0 0.0
        %1292 = vmatpush2.msra.mxu0 0.0
        %1293 = vmatprep.subr.mxu0 0.0
        %1294 = vmatpush2.msra.mxu0 0.0
        %1295 = vmatprep.subr.mxu0 0.0
        %1296 = vmatpush2.msra.mxu0 0.0
        %1297 = vmatprep.subr.mxu0 0.0
        %1298 = vmatpush2.msra.mxu0 0.0
        %1299 = vmatprep.subr.mxu0 0.0
        %1300 = vmatpush2.msra.mxu0 0.0
        %1301 = vmatprep.subr.mxu0 0.0
        %1302 = vmatpush2.msra.mxu0 0.0
        %1303 = vmatprep.subr.mxu0 0.0
        %1304 = vmatpush2.msra.mxu0 0.0
        %1305 = vmatprep.subr.mxu0 0.0
        %1306 = vmatpush2.msra.mxu0 0.0
        %1307 = vmatprep.subr.mxu0 0.0
        %1308 = vmatpush2.msra.mxu0 0.0
        %1309 = vmatprep.subr.mxu0 0.0
        %1310 = vmatpush2.msra.mxu0 0.0
        %1311 = vmatprep.subr.mxu0 0.0
        %1312 = vmatpush2.msra.mxu0 0.0
        %1313 = vmatprep.mubr.f32.mxu0 0.0
        %1314 = vmatmul.mubr.f32.gmra.mxu0 %v1247
        %v1315 = vpop.f32.mrf.mxu0
        %v1316 = vadd.f32 0.0, %v1315
        %v1317 = vpop.f32.mrf.mxu0
        %1318 = vdwg.mxu0
        %v1319 = vmul.f32 %v1316, 0.17677669
        %v1320 = vadd.f32 %v1319, %v1129
        %v1321 = vsel %vm807, %v1320, -inf
        %v1322 = vrot.slane %v1321, 4
        %v1323 = vmax.f32 %v1321, %v1322
        %v1324 = vrot.slane %v1323, 2
        %v1325 = vmax.f32 %v1323, %v1324
        %v1326 = vrot.slane %v1325, 1
        %v1327 = vmax.f32 %v1325, %v1326
        %v1328 = vsub.f32 %v1320, %v1327
        %v1329 = vmul.f32 %v1328, 1.442695
        %v1330 = vpow.pop %v1329
        %v1331 = vsel %vm807, %v1330, 0.0
        %v1332 = vrot.slane %v1331, 4
        %v1333 = vadd.f32 %v1331, %v1332
        %v1334 = vrot.slane %v1333, 2
        %v1335 = vadd.f32 %v1333, %v1334
        %v1336 = vrot.slane %v1335, 1
        %v1337 = vadd.f32 %v1335, %v1336
        %v1338 = vrcp.pop %v1337
        %v1339 = vmul.f32 %v1330, %v1338
        %v1340 = vsel %vm807, %v1339, 0.0
        %1341 = vadd.xlane.f32.xlu0 %v1340
        %v1342 = vpop.xlane.xlu0 %1341
        %v1343 = vmul.f32 %v1342, 0.015625
        %v1344 = vmul.f32 %v1343, %v1048
        %1346 = vrot.lane.b32.xlu0 %v1344, 96
        %v1347 = vpop.permute.xlu0 %1346
        %vm1349 = vcmask 261248
        %1350 = vst.msk [vmem:[%s604] sm:$0xff] %vm1349, %v1347
        %v1352 = vsel %vm1161, %v976, 0
        %v1355 = vsel %vm1161, %v977, 0
        %1357 = vmatprep.subr.mxu0 0.0
        %1358 = vmatpush1.msra.mxu0 0.0
        %1359 = vmatprep.subr.mxu0 0.0
        %1360 = vmatpush1.msra.mxu0 0.0
        %1361 = vmatprep.subr.mxu0 0.0
        %1362 = vmatpush1.msra.mxu0 0.0
        %1363 = vmatprep.subr.mxu0 0.0
        %1364 = vmatpush1.msra.mxu0 0.0
        %1365 = vmatprep.subr.mxu0 0.0
        %1366 = vmatpush1.msra.mxu0 0.0
        %1367 = vmatprep.subr.mxu0 0.0
        %1368 = vmatpush1.msra.mxu0 0.0
        %1369 = vmatprep.subr.mxu0 0.0
        %1370 = vmatpush1.msra.mxu0 0.0
        %1371 = vmatprep.subr.mxu0 0.0
        %1372 = vmatpush1.msra.mxu0 0.0
        %1373 = vmatprep.subr.mxu0 0.0
        %1374 = vmatpush1.msra.mxu0 0.0
        %1375 = vmatprep.subr.mxu0 0.0
        %1376 = vmatpush1.msra.mxu0 0.0
        %1377 = vmatprep.subr.mxu0 0.0
        %1378 = vmatpush1.msra.mxu0 0.0
        %1379 = vmatprep.subr.mxu0 0.0
        %1380 = vmatpush1.msra.mxu0 0.0
        %1381 = vmatprep.subr.mxu0 0.0
        %1382 = vmatpush1.msra.mxu0 0.0
        %1383 = vmatprep.subr.mxu0 0.0
        %1384 = vmatpush1.msra.mxu0 0.0
        %1385 = vmatprep.subr.mxu0 0.0
        %1386 = vmatpush1.msra.mxu0 0.0
        %1387 = vmatprep.subr.mxu0 0.0
        %1388 = vmatpush1.msra.mxu0 %v1339
        %1389 = vmatprep.subr.mxu0 0.0
        %1390 = vmatpush2.msra.mxu0 0.0
        %1391 = vmatprep.subr.mxu0 0.0
        %1392 = vmatpush2.msra.mxu0 0.0
        %1393 = vmatprep.subr.mxu0 0.0
        %1394 = vmatpush2.msra.mxu0 0.0
        %1395 = vmatprep.subr.mxu0 0.0
        %1396 = vmatpush2.msra.mxu0 0.0
        %1397 = vmatprep.subr.mxu0 0.0
        %1398 = vmatpush2.msra.mxu0 0.0
        %1399 = vmatprep.subr.mxu0 0.0
        %1400 = vmatpush2.msra.mxu0 0.0
        %1401 = vmatprep.subr.mxu0 0.0
        %1402 = vmatpush2.msra.mxu0 0.0
        %1403 = vmatprep.subr.mxu0 0.0
        %1404 = vmatpush2.msra.mxu0 0.0
        %1405 = vmatprep.subr.mxu0 0.0
        %1406 = vmatpush2.msra.mxu0 0.0
        %1407 = vmatprep.subr.mxu0 0.0
        %1408 = vmatpush2.msra.mxu0 0.0
        %1409 = vmatprep.subr.mxu0 0.0
        %1410 = vmatpush2.msra.mxu0 0.0
        %1411 = vmatprep.subr.mxu0 0.0
        %1412 = vmatpush2.msra.mxu0 0.0
        %1413 = vmatprep.subr.mxu0 0.0
        %1414 = vmatpush2.msra.mxu0 0.0
        %1415 = vmatprep.subr.mxu0 0.0
        %1416 = vmatpush2.msra.mxu0 0.0
        %1417 = vmatprep.subr.mxu0 0.0
        %1418 = vmatpush2.msra.mxu0 0.0
        %1419 = vmatprep.subr.mxu0 0.0
        %1420 = vmatpush2.msra.mxu0 0.0
        %1421 = vmatprep.mubr.f32.mxu0 0.0
        %1422 = vmatmul.mubr.f32.gmra.mxu0 %v1352
        %v1423 = vpop.f32.mrf.mxu0
        %v1424 = vadd.f32 0.0, %v1423
        %v1425 = vpop.f32.mrf.mxu0
        %1426 = vmatprep.mubr.f32.mxu0 0.0
        %1427 = vmatmul.mubr.f32.gmra.mxu0 %v1355
        %v1428 = vpop.f32.mrf.mxu0
        %v1429 = vadd.f32 0.0, %v1428
        %v1430 = vpop.f32.mrf.mxu0
        %1431 = vdwg.mxu0
        %1432 = vst.msk [vmem:[#allocation2 + $0x10] sm:$0xff] %vm807, %v1424
        %1433 = vst.msk [vmem:[#allocation2 + $0x18] sm:$0xff] %vm807, %v1429
        %v1434 = vld [vmem:[%s11] sm:$0xf]
        %v1435 = vld [vmem:[%s11 + $0x4] sm:$0xf]
        %v1436 = vld [vmem:[%s11 + $0x8] sm:$0xf]
        %v1437 = vld [vmem:[%s11 + $0xc] sm:$0xf]
        %v1438 = vld [vmem:[#allocation2] sm:$0xff]
        %v1439 = vld [vmem:[#allocation2 + $0x8] sm:$0xff]
        %v1440 = vld [vmem:[#allocation2 + $0x10] sm:$0xff]
        %v1441 = vld [vmem:[#allocation2 + $0x18] sm:$0xff]
        %v1442 = vpack.c.bf16 %v1439, %v1438
        %v1443 = vpack.c.bf16 %v1441, %v1440
        %v1444 = vld [vmem:[%s12] sm:$0xff]
        %v1445 = vld [vmem:[%s12 + $0x8] sm:$0xff]
        %v1446 = vld [vmem:[%s12 + $0x10] sm:$0xff]
        %v1447 = vld [vmem:[%s12 + $0x18] sm:$0xff]
        %1449 = vset.pattern.permute.xlu0 0
        %1450 = vperm.xlu0 %1449, %v1444
        %v1451 = vpop.permute.xlu0 %1450
        %1454 = vset.pattern.permute.xlu0 0
        %1455 = vperm.xlu0 %1454, %v1445
        %v1456 = vpop.permute.xlu0 %1455
        %1459 = vset.pattern.permute.xlu0 0
        %1460 = vperm.xlu0 %1459, %v1446
        %v1461 = vpop.permute.xlu0 %1460
        %1464 = vset.pattern.permute.xlu0 0
        %1465 = vperm.xlu0 %1464, %v1447
        %v1466 = vpop.permute.xlu0 %1465
        %v1472 = vunpack.c.l.b16 %v1434
        %v1473 = vunpack.c.l.b16 %v1435
        %v1474 = vunpack.c.l.b16 %v1436
        %v1475 = vunpack.c.l.b16 %v1437
        %v1476 = vpack.c.b16 %v1473, %v1472
        %v1477 = vpack.c.b16 %v1475, %v1474
        %v1479 = vsel %vm725, %v1476, 0
        %v1482 = vsel %vm725, %v1477, 0
        %1484 = vmatprep.subr.bf16.mxu0 0
        %1485 = vmatpush1.bf16.msra.mxu0 0
        %1486 = vmatprep.subr.bf16.mxu0 0
        %1487 = vmatpush1.bf16.msra.mxu0 0
        %1488 = vmatprep.subr.bf16.mxu0 0
        %1489 = vmatpush1.bf16.msra.mxu0 0
        %1490 = vmatprep.subr.bf16.mxu0 0
        %1491 = vmatpush1.bf16.msra.mxu0 0
        %1492 = vmatprep.subr.bf16.mxu0 0
        %1493 = vmatpush1.bf16.msra.mxu0 0
        %1494 = vmatprep.subr.bf16.mxu0 0
        %1495 = vmatpush1.bf16.msra.mxu0 0
        %1496 = vmatprep.subr.bf16.mxu0 0
        %1497 = vmatpush1.bf16.msra.mxu0 %v1443
        %1498 = vmatprep.subr.bf16.mxu0 0
        %1499 = vmatpush1.bf16.msra.mxu0 %v1442
        %1500 = vmatprep.subr.bf16.mxu0 0
        %1501 = vmatpush2.bf16.msra.mxu0 0
        %1502 = vmatprep.subr.bf16.mxu0 0
        %1503 = vmatpush2.bf16.msra.mxu0 0
        %1504 = vmatprep.subr.bf16.mxu0 0
        %1505 = vmatpush2.bf16.msra.mxu0 0
        %1506 = vmatprep.subr.bf16.mxu0 0
        %1507 = vmatpush2.bf16.msra.mxu0 0
        %1508 = vmatprep.subr.bf16.mxu0 0
        %1509 = vmatpush2.bf16.msra.mxu0 0
        %1510 = vmatprep.subr.bf16.mxu0 0
        %1511 = vmatpush2.bf16.msra.mxu0 0
        %1512 = vmatprep.subr.bf16.mxu0 0
        %1513 = vmatpush2.bf16.msra.mxu0 0
        %1514 = vmatprep.subr.bf16.mxu0 0
        %1515 = vmatpush2.bf16.msra.mxu0 0
        %1516 = vmatprep.mubr.bf16.mxu0 0
        %1517 = vmatmul.mubr.bf16.gmra.mxu0 %v1479
        %v1518 = vpop.f32.mrf.mxu0
        %v1519 = vadd.f32 %v1451, %v1518
        %v1520 = vpop.f32.mrf.mxu0
        %v1521 = vpop.f32.mrf.mxu0
        %v1522 = vadd.f32 %v1456, %v1521
        %v1523 = vpop.f32.mrf.mxu0
        %1524 = vmatprep.mubr.bf16.mxu0 0
        %1525 = vmatmul.mubr.bf16.gmra.mxu0 %v1482
        %v1526 = vpop.f32.mrf.mxu0
        %v1527 = vadd.f32 %v1461, %v1526
        %v1528 = vpop.f32.mrf.mxu0
        %v1529 = vpop.f32.mrf.mxu0
        %v1530 = vadd.f32 %v1466, %v1529
        %v1531 = vpop.f32.mrf.mxu0
        %1532 = vdwg.mxu0
        %v1533 = vsel %vm807, %v1519, 0.0
        %1534 = vadd.xlane.f32.xlu0 %v1533
        %v1535 = vpop.xlane.xlu0 %1534
        %v1536 = vsel %vm807, %v1522, 0.0
        %1537 = vadd.xlane.f32.xlu0 %v1536
        %v1538 = vpop.xlane.xlu0 %1537
        %v1539 = vsel %vm807, %v1527, 0.0
        %1540 = vadd.xlane.f32.xlu0 %v1539
        %v1541 = vpop.xlane.xlu0 %1540
        %v1542 = vsel %vm807, %v1530, 0.0
        %1543 = vadd.xlane.f32.xlu0 %v1542
        %v1544 = vpop.xlane.xlu0 %1543
        %v1545 = vmul.f32 %v1535, %v820
        %v1546 = vmul.f32 %v1538, %v820
        %v1547 = vmul.f32 %v1541, %v820
        %v1548 = vmul.f32 %v1544, %v820
        %v1549 = vsub.f32 %v1519, %v1545
        %v1550 = vsub.f32 %v1522, %v1546
        %v1551 = vsub.f32 %v1527, %v1547
        %v1552 = vsub.f32 %v1530, %v1548
        %v1553 = vmul.f32 %v1549, %v1549
        %v1554 = vmul.f32 %v1550, %v1550
        %v1555 = vmul.f32 %v1551, %v1551
        %v1556 = vmul.f32 %v1552, %v1552
        %v1557 = vsel %vm807, %v1553, 0.0
        %1558 = vadd.xlane.f32.xlu0 %v1557
        %v1559 = vpop.xlane.xlu0 %1558
        %v1560 = vsel %vm807, %v1554, 0.0
        %1561 = vadd.xlane.f32.xlu0 %v1560
        %v1562 = vpop.xlane.xlu0 %1561
        %v1563 = vsel %vm807, %v1555, 0.0
        %1564 = vadd.xlane.f32.xlu0 %v1563
        %v1565 = vpop.xlane.xlu0 %1564
        %v1566 = vsel %vm807, %v1556, 0.0
        %1567 = vadd.xlane.f32.xlu0 %v1566
        %v1568 = vpop.xlane.xlu0 %1567
        %v1569 = vmul.f32 %v1559, %v820
        %v1570 = vmul.f32 %v1562, %v820
        %v1571 = vmul.f32 %v1565, %v820
        %v1572 = vmul.f32 %v1568, %v820
        %v1573 = vadd.f32 %v1569, 1e-05
        %v1574 = vadd.f32 %v1570, 1e-05
        %v1575 = vadd.f32 %v1571, 1e-05
        %v1576 = vadd.f32 %v1572, 1e-05
        %v1577 = vrsqrt.pop %v1573
        %v1578 = vrsqrt.pop %v1574
        %v1579 = vrsqrt.pop %v1575
        %v1580 = vrsqrt.pop %v1576
        %v1581 = vmul.f32 %v1549, %v1577
        %v1582 = vmul.f32 %v1550, %v1578
        %v1583 = vmul.f32 %v1551, %v1579
        %v1584 = vmul.f32 %v1552, %v1580
        %v1585 = vmul.f32 %v803, %v1581
        %v1586 = vmul.f32 %v804, %v1582
        %v1587 = vmul.f32 %v805, %v1583
        %v1588 = vmul.f32 %v806, %v1584
        %v1589 = vpack.c.bf16 %v1586, %v1585
        %v1590 = vpack.c.bf16 %v1588, %v1587
        %v1591 = vld [vmem:[%s13] sm:$0xf]
        %v1592 = vld [vmem:[%s13 + $0x4] sm:$0xf]
        %v1593 = vld [vmem:[%s13 + $0x8] sm:$0xf]
        %v1594 = vld [vmem:[%s13 + $0xc] sm:$0xf]
        %v1595 = vld [vmem:[%s14] sm:$0xff]
        %v1596 = vld [vmem:[%s14 + $0x8] sm:$0xff]
        %v1597 = vld [vmem:[%s14 + $0x10] sm:$0xff]
        %v1598 = vld [vmem:[%s14 + $0x18] sm:$0xff]
        %1600 = vset.pattern.permute.xlu0 0
        %1601 = vperm.xlu0 %1600, %v1595
        %v1602 = vpop.permute.xlu0 %1601
        %1605 = vset.pattern.permute.xlu0 0
        %1606 = vperm.xlu0 %1605, %v1596
        %v1607 = vpop.permute.xlu0 %1606
        %1610 = vset.pattern.permute.xlu0 0
        %1611 = vperm.xlu0 %1610, %v1597
        %v1612 = vpop.permute.xlu0 %1611
        %1615 = vset.pattern.permute.xlu0 0
        %1616 = vperm.xlu0 %1615, %v1598
        %v1617 = vpop.permute.xlu0 %1616
        %v1623 = vunpack.c.l.b16 %v1591
        %v1624 = vunpack.c.l.b16 %v1592
        %v1625 = vunpack.c.l.b16 %v1593
        %v1626 = vunpack.c.l.b16 %v1594
        %v1627 = vpack.c.b16 %v1624, %v1623
        %v1628 = vpack.c.b16 %v1626, %v1625
        %v1630 = vsel %vm725, %v1627, 0
        %v1633 = vsel %vm725, %v1628, 0
        %1635 = vmatprep.subr.bf16.mxu0 0
        %1636 = vmatpush1.bf16.msra.mxu0 0
        %1637 = vmatprep.subr.bf16.mxu0 0
        %1638 = vmatpush1.bf16.msra.mxu0 0
        %1639 = vmatprep.subr.bf16.mxu0 0
        %1640 = vmatpush1.bf16.msra.mxu0 0
        %1641 = vmatprep.subr.bf16.mxu0 0
        %1642 = vmatpush1.bf16.msra.mxu0 0
        %1643 = vmatprep.subr.bf16.mxu0 0
        %1644 = vmatpush1.bf16.msra.mxu0 0
        %1645 = vmatprep.subr.bf16.mxu0 0
        %1646 = vmatpush1.bf16.msra.mxu0 0
        %1647 = vmatprep.subr.bf16.mxu0 0
        %1648 = vmatpush1.bf16.msra.mxu0 %v1590
        %1649 = vmatprep.subr.bf16.mxu0 0
        %1650 = vmatpush1.bf16.msra.mxu0 %v1589
        %1651 = vmatprep.subr.bf16.mxu0 0
        %1652 = vmatpush2.bf16.msra.mxu0 0
        %1653 = vmatprep.subr.bf16.mxu0 0
        %1654 = vmatpush2.bf16.msra.mxu0 0
        %1655 = vmatprep.subr.bf16.mxu0 0
        %1656 = vmatpush2.bf16.msra.mxu0 0
        %1657 = vmatprep.subr.bf16.mxu0 0
        %1658 = vmatpush2.bf16.msra.mxu0 0
        %1659 = vmatprep.subr.bf16.mxu0 0
        %1660 = vmatpush2.bf16.msra.mxu0 0
        %1661 = vmatprep.subr.bf16.mxu0 0
        %1662 = vmatpush2.bf16.msra.mxu0 0
        %1663 = vmatprep.subr.bf16.mxu0 0
        %1664 = vmatpush2.bf16.msra.mxu0 0
        %1665 = vmatprep.subr.bf16.mxu0 0
        %1666 = vmatpush2.bf16.msra.mxu0 0
        %1667 = vmatprep.mubr.bf16.mxu0 0
        %1668 = vmatmul.mubr.bf16.gmra.mxu0 %v1630
        %v1669 = vpop.f32.mrf.mxu0
        %v1670 = vadd.f32 %v1602, %v1669
        %v1671 = vpop.f32.mrf.mxu0
        %v1672 = vpop.f32.mrf.mxu0
        %v1673 = vadd.f32 %v1607, %v1672
        %v1674 = vpop.f32.mrf.mxu0
        %1675 = vmatprep.mubr.bf16.mxu0 0
        %1676 = vmatmul.mubr.bf16.gmra.mxu0 %v1633
        %v1677 = vpop.f32.mrf.mxu0
        %v1678 = vadd.f32 %v1612, %v1677
        %v1679 = vpop.f32.mrf.mxu0
        %v1680 = vpop.f32.mrf.mxu0
        %v1681 = vadd.f32 %v1617, %v1680
        %v1682 = vpop.f32.mrf.mxu0
        %1683 = vdwg.mxu0
        %v1684 = vmax.f32 %v1670, 0.0
        %v1685 = vmax.f32 %v1673, 0.0
        %v1686 = vmax.f32 %v1678, 0.0
        %v1687 = vmax.f32 %v1681, 0.0
        %v1688 = vpack.c.bf16 %v1685, %v1684
        %v1689 = vpack.c.bf16 %v1687, %v1686
        %v1692 = vunpack.c.l.b16 %v1688
        %v1693 = vunpack.c.h.b16 %v1688
        %v1694 = vunpack.c.l.b16 %v1689
        %v1695 = vunpack.c.h.b16 %v1689
        %v1696 = vpack.c.b16 %v1692, %v1692
        %v1697 = vpack.c.b16 %v1693, %v1693
        %v1698 = vpack.c.b16 %v1694, %v1694
        %v1699 = vpack.c.b16 %v1695, %v1695
        %vm1704 = vcmask 519168
        %1705 = vst.msk [vmem:[%s597] sm:$0xf] %vm1704, %v1696
        %1706 = vst.msk [vmem:[%s597 + $0x4] sm:$0xf] %vm1704, %v1697
        %1707 = vst.msk [vmem:[%s597 + $0x8] sm:$0xf] %vm1704, %v1698
        %1708 = vst.msk [vmem:[%s597 + $0xc] sm:$0xf] %vm1704, %v1699
        %s1709 = sand.u32 %s404, 1
        %s1710 = scalar_lea.sflag [#allocation4], %s1709
        %s1711 = sand.u32 %s404, 1
        %s1712 = smul.addr %s1711, 16
        %s1713 = scalar_lea.vmem [#allocation3], %s1712
        %s1714 = sand.u32 %s430, 1
        %s1715 = scalar_lea.sflag [#allocation6], %s1714
        %s1716 = sand.u32 %s430, 1
        %s1717 = smul.addr %s1716, 8
        %s1718 = scalar_lea.vmem [#allocation5], %s1717
        // Predicated region
        $region85: #{tpu_custom_call.1} parent=83 // pred_check
          %p1719 = pneg %p414
        $region86: #{tpu_custom_call.1} parent=83 // pred_check_branch
          %1721 = sbr.rel (%p1719) target = $region88
        $region87: #{tpu_custom_call.1} parent=83 // pred_region
          %s1723 = ssub.s32 256, 256
          %1724 = vsyncadd %s1710, %s1723
          %s1725 = smul.addr %s35, 4
          %s1726 = smul.addr %s1725, 64
          %s1727 = scalar_lea.hbm %s16, %s1726
          %s1728 = sshll.u32 %s1713, 4
          %s1729 = int_to_ptr.vmem [resolvable:$true] %s1728
          %1734 = dma.vmem_to_hbm [thread:$0]  %s1729, 256, %s1727, %s1710, 64, 64, 4
        $region88: #{tpu_custom_call.1} parent=83 // pred_fallthru
          _
        // Predicated region
        $region89: #{tpu_custom_call.1} parent=83 // pred_check
          %p1735 = pneg %p440
        $region90: #{tpu_custom_call.1} parent=83 // pred_check_branch
          %1737 = sbr.rel (%p1735) target = $region92
        $region91: #{tpu_custom_call.1} parent=83 // pred_region
          %s1739 = ssub.s32 128, 128
          %1740 = vsyncadd %s1715, %s1739
          %s1741 = smul.addr %s35, 128
          %s1742 = scalar_lea.hbm %s17, %s1741
          %s1744 = sshll.u32 %s1718, 4
          %s1745 = int_to_ptr.vmem [resolvable:$true] %s1744
          %1747 = dma.vmem_to_hbm [thread:$0]  %s1745, 128, %s1742, %s1715
        $region92: #{tpu_custom_call.1} parent=83 // pred_fallthru
          _
      $region84: #{tpu_custom_call.1} parent=5 // pred_fallthru
        _
      %p1748 = scmp.le.s32.totalorder 2, %s30
      // Predicated region
      $region93: #{tpu_custom_call.1} parent=5 // pred_check
        %p1749 = pneg %p1748
      $region94: #{tpu_custom_call.1} parent=5 // pred_check_branch
        %1751 = sbr.rel (%p1749) target = $region96
      $region95: #{tpu_custom_call.1} parent=5 // pred_region
        %s1752 = ssub.s32 %s30, 2
        // Predicated region
        $region97: #{tpu_custom_call.1} parent=95 // pred_check
          %p1753 = pneg %p420
        $region98: #{tpu_custom_call.1} parent=95 // pred_check_branch
          %1755 = sbr.rel (%p1753) target = $region100
        $region99: #{tpu_custom_call.1} parent=95 // pred_region
          %s1756 = sand.u32 %s405, 1
          %s1757 = scalar_lea.sflag [#allocation4], %s1756
          %s1758 = sand.u32 %s405, 1
          %s1759 = smul.addr %s1758, 16
          %s1760 = scalar_lea.vmem [#allocation3], %s1759
          %1761 = dma.done %s1757, 256
        $region100: #{tpu_custom_call.1} parent=95 // pred_fallthru
          _
        // Predicated region
        $region101: #{tpu_custom_call.1} parent=95 // pred_check
          %p1762 = pneg %p446
        $region102: #{tpu_custom_call.1} parent=95 // pred_check_branch
          %1764 = sbr.rel (%p1762) target = $region104
        $region103: #{tpu_custom_call.1} parent=95 // pred_region
          %s1765 = sand.u32 %s431, 1
          %s1766 = scalar_lea.sflag [#allocation6], %s1765
          %s1767 = sand.u32 %s431, 1
          %s1768 = smul.addr %s1767, 8
          %s1769 = scalar_lea.vmem [#allocation5], %s1768
          %1770 = dma.done %s1766, 128
        $region104: #{tpu_custom_call.1} parent=95 // pred_fallthru
          _
      $region96: #{tpu_custom_call.1} parent=5 // pred_fallthru
        _
    $region6: #{tpu_custom_call.1} parent=1 // loop_footer
      %s34 = sadd.s32 1, %s30
    $region7: #{tpu_custom_call.1} parent=1 // loop_footer_branch
      %29 = sbr.rel target = $region3
    $region8: #{tpu_custom_call.1} parent=1 // loop_exit
      _
    %1771 = vsyncpa [#allocation4], 1
    %s1772 = scalar_lea.sflag [#allocation4], 1
    %1773 = vsyncpa %s1772, 1
    %1774 = vsyncpa [#allocation6], 1
    %s1775 = scalar_lea.sflag [#allocation6], 1
    %1776 = vsyncpa %s1775, 1

</llo_original>
